<compile_context>
chip_gen: v7x
topology: tpu7x:2x2x1
jax: 0.10.0
libtpu: 0.0.40
codegen_flags: <defaults>
</compile_context>

<pallas_src>
import functools

import jax
import jax.numpy as jnp
from jax.experimental import pallas as pl
from jax.experimental.pallas import tpu as pltpu


def _round_up(x, m):
    return ((x + m - 1) // m) * m


# ---------------------------------------------------------------------------
# Kernel: one lane-dense MXU matmul (+ bias + ReLU) per grid step.
# ---------------------------------------------------------------------------
def _matmul_bias_act_kernel(x_ref, w_ref, b_ref, o_ref, *, use_bias, activation):
    """Grid = (batch, m_tiles).

    x_ref : (1, m_tile, K_pad)      im2col rows for this (batch, tile)
    w_ref : (K_pad, Cout_pad)       pre-masked, flattened, zero-padded weights
    b_ref : (1, Cout_pad)           bias (zero-padded)
    o_ref : (1, m_tile, Cout_pad)   lane-dense output slab
    """
    acc = jnp.dot(x_ref[0], w_ref[...], preferred_element_type=jnp.float32)
    if use_bias:
        acc = acc + b_ref[...].astype(jnp.float32)
    if activation == "relu":
        acc = jnp.maximum(acc, 0.0)
    o_ref[0] = acc.astype(o_ref.dtype)


# ---------------------------------------------------------------------------
# Generation-aware sizing helpers.
# ---------------------------------------------------------------------------
def _tpu_params():
    """Returns (vmem_capacity_bytes, tensorcores_per_chip) with safe fallbacks."""
    vmem_cap = 128 * 1024 * 1024
    cores = None
    try:
        info = pltpu.get_tpu_info()
        vmem_cap = int(info.vmem_capacity_bytes)
        for attr in ("num_tensorcores", "tensorcores_per_chip", "num_cores"):
            if hasattr(info, attr):
                cores = int(getattr(info, attr))
                break
    except Exception:
        pass
    if cores is None:
        # Heuristic: 64 MiB-per-core VMEM chips (v7x-class) have 2 TCs/chip.
        cores = 2 if vmem_cap <= 64 * 1024 * 1024 else 1
    return vmem_cap, cores


def _pick_m_tile(m, k_pad, cout_pad, n_batch, vmem_cap, cores):
    """Pick (m_tile, m_padded, vmem_limit_bytes).

    Largest 8-aligned M tile whose (double-buffered) VMEM footprint fits the
    generation-aware budget -> fewest grid steps. On 2-TensorCore chips keep
    at least 2 parallel grid blocks in total so both cores get work.
    """
    m8 = _round_up(m, 8)
    small_vmem = vmem_cap <= 64 * 1024 * 1024            # v7x-class
    out_block_cap = (2 << 20) if small_vmem else (8 << 20)
    vmem_limit = min(vmem_cap, (48 << 20) if small_vmem else (64 << 20))
    budget = int(vmem_limit * 0.75)                      # headroom for scratch

    def fits(t):
        need = (2 * t * k_pad            # im2col block, double-buffered
                + 2 * t * cout_pad       # output block, double-buffered
                + 2 * k_pad * cout_pad   # weights (worst-case double-buffered)
                + 2 * cout_pad) * 4      # bias
        return t * cout_pad * 4 <= out_block_cap and need <= budget

    n_tiles = 1
    while True:
        t = _round_up(-(-m8 // n_tiles), 8)
        if t <= 8 or fits(t):
            break
        n_tiles += 1
    # TODO(synk): if even t == 8 does not fit (huge K*Cout), also tile K/Cout
    # with an accumulator + "arbitrary" reduction axis.

    if cores >= 2 and n_batch * (-(-m8 // t)) < 2 and m8 >= 16:
        # 2 TensorCores per chip: never collapse to a single grid block.
        t = _round_up(-(-m8 // 2), 8)

    num_tiles = -(-m8 // t)
    return t, t * num_tiles, vmem_limit


def _build_conv_call(n, m_padded, m_tile, k_pad, cout_pad, out_dtype, kernel,
                     vmem_limit, flops, bytes_accessed, single_buffer_consts):
    const_kwargs = {}
    if single_buffer_consts:
        # Weights/bias never change across the grid: one buffer is enough.
        const_kwargs = dict(pipeline_mode=pl.Buffered(1))
    return pl.pallas_call(
        kernel,
        out_shape=jax.ShapeDtypeStruct((n, m_padded, cout_pad), out_dtype),
        grid_spec=pltpu.PrefetchScalarGridSpec(
            num_scalar_prefetch=0,
            grid=(n, m_padded // m_tile),
            in_specs=[
                pl.BlockSpec((1, m_tile, k_pad), lambda b, r: (b, r, 0)),
                pl.BlockSpec((k_pad, cout_pad), lambda b, r: (0, 0),
                             **const_kwargs),
                pl.BlockSpec((1, cout_pad), lambda b, r: (0, 0),
                             **const_kwargs),
            ],
            out_specs=pl.BlockSpec((1, m_tile, cout_pad),
                                   lambda b, r: (b, r, 0)),
        ),
        compiler_params=pltpu.CompilerParams(
            dimension_semantics=("parallel", "parallel"),
            vmem_limit_bytes=vmem_limit),
        cost_estimate=pl.CostEstimate(flops=flops, transcendentals=0,
                                      bytes_accessed=bytes_accessed),
    )


# ---------------------------------------------------------------------------
# Wrapper: layout glue + wrapper-side im2col + pallas_call.
# ---------------------------------------------------------------------------
def masked_conv2d(x_nchw, weights, mask, bias, *, stride=1, padding=0,
                  activation=None):
    """Forward pass of MaskedConvLayer.

    x_nchw  : (N, Cin, H, W)      float32
    weights : (Cout, Cin, KH, KW) float32   (torch OIHW layout)
    mask    : (Cout, Cin, KH, KW) float32
    bias    : (Cout,) float32 or None
    returns : (N, Cout, Ho, Wo)   float32
    """
    n, cin, h, w = x_nchw.shape
    cout, _, kh, kw = weights.shape
    use_bias = bias is not None

    # ---- glue (plain JAX): NHWC layout, spatial padding, im2col ----
    # TODO(synk): in a multi-layer network keep activations NHWC / as im2col
    # slabs across layers to drop the per-call NCHW<->NHWC transpose traffic,
    # and cache w_eff/b_pad instead of rebuilding them per call.
    x = jnp.transpose(x_nchw, (0, 2, 3, 1))                 # NHWC
    if padding > 0:
        x = jnp.pad(x, ((0, 0), (padding, padding), (padding, padding), (0, 0)))
    hp, wp = x.shape[1], x.shape[2]
    oh = (hp - kh) // stride + 1
    ow = (wp - kw) // stride + 1
    m = oh * ow
    k_dim = kh * kw * cin

    cout_pad = _round_up(cout, 128)          # lane-dense output
    k_pad = _round_up(k_dim, 128)            # MXU-aligned contraction

    # im2col hoisted out of the kernel; column order (kh, kw, cin) matches the
    # row order of the flattened HWIO weights below.
    cols = []
    for i in range(kh):
        for j in range(kw):
            cols.append(x[:, i:i + (oh - 1) * stride + 1:stride,
                            j:j + (ow - 1) * stride + 1:stride, :])
    x_cols = jnp.concatenate(cols, axis=-1).reshape(n, m, k_dim)   # (N, M, K)

    # Fold the pruning mask into the weights ONCE; flatten to (K, Cout); pad.
    w_eff = jnp.transpose(weights * mask, (2, 3, 1, 0)).reshape(k_dim, cout)
    w_eff = jnp.pad(w_eff, ((0, k_pad - k_dim), (0, cout_pad - cout))).astype(x.dtype)
    b_vec = bias if use_bias else jnp.zeros((cout,), x.dtype)
    b_pad = jnp.pad(b_vec, (0, cout_pad - cout)).reshape(1, cout_pad).astype(x.dtype)

    vmem_cap, cores = _tpu_params()
    m_tile, m_padded, vmem_limit = _pick_m_tile(m, k_pad, cout_pad, n,
                                                vmem_cap, cores)
    x_cols = jnp.pad(x_cols, ((0, 0), (0, m_padded - m), (0, k_pad - k_dim)))

    kernel = functools.partial(_matmul_bias_act_kernel, use_bias=use_bias,
                               activation=activation)
    flops = 2 * n * m * k_dim * cout
    bytes_accessed = 4 * (x_cols.size + w_eff.size + b_pad.size
                          + n * m_padded * cout_pad)

    args = (n, m_padded, m_tile, k_pad, cout_pad, x_nchw.dtype, kernel,
            vmem_limit, flops, bytes_accessed)
    try:
        out_flat = _build_conv_call(*args, single_buffer_consts=True)(
            x_cols, w_eff, b_pad)
    except Exception:
        # Fallback if this JAX/Mosaic build rejects pipeline_mode=pl.Buffered(1);
        # double-buffered constant blocks are functionally identical.
        out_flat = _build_conv_call(*args, single_buffer_consts=False)(
            x_cols, w_eff, b_pad)

    out = out_flat[:, :m, :cout].reshape(n, oh, ow, cout)   # drop M/Cout pad
    return jnp.transpose(out, (0, 3, 1, 2))                 # back to NCHW


def _reference(x_nchw, weights, mask, bias, *, stride, padding, activation):
    """Pure-JAX reference mirroring F.conv2d semantics."""
    out = jax.lax.conv_general_dilated(
        x_nchw, weights * mask,
        window_strides=(stride, stride),
        padding=[(padding, padding), (padding, padding)],
        dimension_numbers=("NCHW", "OIHW", "NCHW"))
    if bias is not None:
        out = out + bias.reshape(1, -1, 1, 1)
    if activation == "relu":
        out = jnp.maximum(out, 0.0)
    return out


if __name__ == "__main__":
    # Module config: shape = (Cout, Cin, KH, KW), bias=True, stride=1,
    # padding=1, activation='relu'
    N, CIN, H, W = 2, 4, 16, 16
    COUT, KH, KW = 8, 3, 3
    STRIDE, PADDING, ACT = 1, 1, "relu"

    key = jax.random.PRNGKey(0)
    kx, kw_ = jax.random.split(key)

    # xavier_uniform_ for OIHW conv weights: fan_in = Cin*KH*KW, fan_out = Cout*KH*KW
    fan_in, fan_out = CIN * KH * KW, COUT * KH * KW
    bound = (6.0 / (fan_in + fan_out)) ** 0.5
    weights = jax.random.uniform(kw_, (COUT, CIN, KH, KW), jnp.float32,
                                 minval=-bound, maxval=bound)
    mask = jnp.ones((COUT, CIN, KH, KW), jnp.float32)   # pruning mask (all ones at init)
    bias = jnp.zeros((COUT,), jnp.float32)              # bias initialized to zeros

    x = jax.random.normal(kx, (N, CIN, H, W), jnp.float32)

    out = masked_conv2d(x, weights, mask, bias, stride=STRIDE,
                        padding=PADDING, activation=ACT)
    out = jax.block_until_ready(out)

    ref = _reference(x, weights, mask, bias, stride=STRIDE,
                     padding=PADDING, activation=ACT)

    assert out.shape == (N, COUT, H, W), out.shape
    assert jnp.allclose(out, ref, atol=1e-4, rtol=1e-4), "mismatch vs reference"
    print("KERNEL_OK")
</pallas_src>

<mosaic_0001>
module attributes {stable_mosaic.version = 11 : i64} {
  func.func @_matmul_bias_act_kernel(%arg0: i32, %arg1: i32, %arg2: memref<1x256x128xf32, #tpu.memory_space<vmem>>, %arg3: memref<128x128xf32, #tpu.memory_space<vmem>>, %arg4: memref<1x128xf32, #tpu.memory_space<vmem>>, %arg5: memref<1x256x128xf32, #tpu.memory_space<vmem>>) attributes {dimension_semantics = [#tpu.dimension_semantics<parallel>, #tpu.dimension_semantics<parallel>], iteration_bounds = array<i64: 2, 1>, scalar_prefetch = 0 : i64, scratch_operands = 0 : i64, tpu.core_type = #tpu.core_type<tc>, window_params = [{transform_indices = @transform_0, window_bounds = array<i64: 1, 256, 128>}, {pipeline_mode = #tpu.pipeline_mode<synchronous>, transform_indices = @transform_1, window_bounds = array<i64: 128, 128>}, {pipeline_mode = #tpu.pipeline_mode<synchronous>, transform_indices = @transform_2, window_bounds = array<i64: 1, 128>}, {transform_indices = @transform_3, window_bounds = array<i64: 1, 256, 128>}]} {
    %c0 = arith.constant 0 : index
    %c0_0 = arith.constant 0 : index
    %c0_1 = arith.constant 0 : index
    %0 = vector.load %arg2[%c0, %c0_0, %c0_1] : memref<1x256x128xf32, #tpu.memory_space<vmem>>, vector<1x256x128xf32>
    %1 = vector.shape_cast %0 : vector<1x256x128xf32> to vector<256x128xf32>
    %c0_2 = arith.constant 0 : index
    %c0_3 = arith.constant 0 : index
    %2 = vector.load %arg3[%c0_2, %c0_3] : memref<128x128xf32, #tpu.memory_space<vmem>>, vector<128x128xf32>
    %cst = arith.constant dense<0.000000e+00> : vector<256x128xf32>
    %3 = tpu.matmul %1, %2, %cst {dimension_numbers = #tpu.dot_dimension_numbers<[1], [0], [0], [1], [0, 0, 1, 1], [], []>} : vector<256x128xf32>, vector<128x128xf32>, vector<256x128xf32> -> vector<256x128xf32>
    %c0_4 = arith.constant 0 : index
    %c0_5 = arith.constant 0 : index
    %4 = vector.load %arg4[%c0_4, %c0_5] : memref<1x128xf32, #tpu.memory_space<vmem>>, vector<1x128xf32>
    %5 = vector.broadcast %4 : vector<1x128xf32> to vector<256x128xf32>
    %6 = arith.addf %3, %5 : vector<256x128xf32>
    %cst_6 = arith.constant 0.000000e+00 : f32
    %7 = vector.broadcast %cst_6 : f32 to vector<256x128xf32>
    %8 = arith.maximumf %6, %7 : vector<256x128xf32>
    %c0_7 = arith.constant 0 : index
    %c0_8 = arith.constant 0 : index
    %c0_9 = arith.constant 0 : index
    %9 = vector.load %arg5[%c0_7, %c0_8, %c0_9] : memref<1x256x128xf32, #tpu.memory_space<vmem>>, vector<1x256x128xf32>
    %10 = vector.shape_cast %9 : vector<1x256x128xf32> to vector<256x128xf32>
    %11 = vector.shape_cast %8 : vector<256x128xf32> to vector<1x256x128xf32>
    tpu.vector_store %arg5[%c0_7, %c0_8, %c0_9], %11 {strides = array<i32>} : memref<1x256x128xf32, #tpu.memory_space<vmem>>, vector<1x256x128xf32>,
    return
  }
  func.func @transform_0(%arg0: i32, %arg1: i32) -> (i32, i32, i32) {
    %c0_i32 = arith.constant 0 : i32
    %c0_i32_0 = arith.constant 0 : i32
    return %arg0, %arg1, %c0_i32 : i32, i32, i32
  }
  func.func @transform_1(%arg0: i32, %arg1: i32) -> (i32, i32) {
    %c0_i32 = arith.constant 0 : i32
    %c0_i32_0 = arith.constant 0 : i32
    %c0_i32_1 = arith.constant 0 : i32
    return %c0_i32, %c0_i32_0 : i32, i32
  }
  func.func @transform_2(%arg0: i32, %arg1: i32) -> (i32, i32) {
    %c0_i32 = arith.constant 0 : i32
    %c0_i32_0 = arith.constant 0 : i32
    %c0_i32_1 = arith.constant 0 : i32
    return %c0_i32, %c0_i32_0 : i32, i32
  }
  func.func @transform_3(%arg0: i32, %arg1: i32) -> (i32, i32, i32) {
    %c0_i32 = arith.constant 0 : i32
    %c0_i32_0 = arith.constant 0 : i32
    return %arg0, %arg1, %c0_i32 : i32, i32, i32
  }
}

module attributes {stable_mosaic.version = 11 : i64} {
  func.func @_matmul_bias_act_kernel(%arg0: i32, %arg1: i32, %arg2: memref<1x256x128xf32, #tpu.memory_space<vmem>>, %arg3: memref<128x128xf32, #tpu.memory_space<vmem>>, %arg4: memref<1x128xf32, #tpu.memory_space<vmem>>, %arg5: memref<1x256x128xf32, #tpu.memory_space<vmem>>) attributes {dimension_semantics = [#tpu.dimension_semantics<parallel>, #tpu.dimension_semantics<parallel>], iteration_bounds = array<i64: 2, 1>, scalar_prefetch = 0 : i64, scratch_operands = 0 : i64, tpu.core_type = #tpu.core_type<tc>, window_params = [{transform_indices = @transform_0, window_bounds = array<i64: 1, 256, 128>}, {pipeline_mode = #tpu.pipeline_mode<synchronous>, transform_indices = @transform_1, window_bounds = array<i64: 128, 128>}, {pipeline_mode = #tpu.pipeline_mode<synchronous>, transform_indices = @transform_2, window_bounds = array<i64: 1, 128>}, {transform_indices = @transform_3, window_bounds = array<i64: 1, 256, 128>}]} {
    %c0 = arith.constant 0 : index
    %c0_0 = arith.constant 0 : index
    %c0_1 = arith.constant 0 : index
    %0 = vector.load %arg2[%c0, %c0_0, %c0_1] : memref<1x256x128xf32, #tpu.memory_space<vmem>>, vector<1x256x128xf32>
    %1 = vector.shape_cast %0 : vector<1x256x128xf32> to vector<256x128xf32>
    %c0_2 = arith.constant 0 : index
    %c0_3 = arith.constant 0 : index
    %2 = vector.load %arg3[%c0_2, %c0_3] : memref<128x128xf32, #tpu.memory_space<vmem>>, vector<128x128xf32>
    %cst = arith.constant dense<0.000000e+00> : vector<256x128xf32>
    %3 = tpu.matmul %1, %2, %cst {dimension_numbers = #tpu.dot_dimension_numbers<[1], [0], [0], [1], [0, 0, 1, 1], [], []>} : vector<256x128xf32>, vector<128x128xf32>, vector<256x128xf32> -> vector<256x128xf32>
    %c0_4 = arith.constant 0 : index
    %c0_5 = arith.constant 0 : index
    %4 = vector.load %arg4[%c0_4, %c0_5] : memref<1x128xf32, #tpu.memory_space<vmem>>, vector<1x128xf32>
    %5 = vector.broadcast %4 : vector<1x128xf32> to vector<256x128xf32>
    %6 = arith.addf %3, %5 : vector<256x128xf32>
    %cst_6 = arith.constant 0.000000e+00 : f32
    %7 = vector.broadcast %cst_6 : f32 to vector<256x128xf32>
    %8 = arith.maximumf %6, %7 : vector<256x128xf32>
    %c0_7 = arith.constant 0 : index
    %c0_8 = arith.constant 0 : index
    %c0_9 = arith.constant 0 : index
    %9 = vector.load %arg5[%c0_7, %c0_8, %c0_9] : memref<1x256x128xf32, #tpu.memory_space<vmem>>, vector<1x256x128xf32>
    %10 = vector.shape_cast %9 : vector<1x256x128xf32> to vector<256x128xf32>
    %11 = vector.shape_cast %8 : vector<256x128xf32> to vector<1x256x128xf32>
    tpu.vector_store %arg5[%c0_7, %c0_8, %c0_9], %11 {strides = array<i32>} : memref<1x256x128xf32, #tpu.memory_space<vmem>>, vector<1x256x128xf32>,
    return
  }
  func.func @transform_0(%arg0: i32, %arg1: i32) -> (i32, i32, i32) {
    %c0_i32 = arith.constant 0 : i32
    %c0_i32_0 = arith.constant 0 : i32
    return %arg0, %arg1, %c0_i32 : i32, i32, i32
  }
  func.func @transform_1(%arg0: i32, %arg1: i32) -> (i32, i32) {
    %c0_i32 = arith.constant 0 : i32
    %c0_i32_0 = arith.constant 0 : i32
    %c0_i32_1 = arith.constant 0 : i32
    return %c0_i32, %c0_i32_0 : i32, i32
  }
  func.func @transform_2(%arg0: i32, %arg1: i32) -> (i32, i32) {
    %c0_i32 = arith.constant 0 : i32
    %c0_i32_0 = arith.constant 0 : i32
    %c0_i32_1 = arith.constant 0 : i32
    return %c0_i32, %c0_i32_0 : i32, i32
  }
  func.func @transform_3(%arg0: i32, %arg1: i32) -> (i32, i32, i32) {
    %c0_i32 = arith.constant 0 : i32
    %c0_i32_0 = arith.constant 0 : i32
    return %arg0, %arg1, %c0_i32 : i32, i32, i32
  }
}

</mosaic_0001>

<llo_original>
// kernel: tpu_custom_call.1
$region0: #{tpu_custom_call.1}
  #allocation0 [shape = 'u32[]', space=smem, size = 0x4, offset = 0x4, fixed_abs, tag = 'smem constant byte address 0x4 - core index']
  #allocation1 [shape = 'u32[144,128]{1,0:T(1,128)}', space=vmem, size = 0x12000, scoped, tag = 'internal scratch']
  %s0 = inlined_call_operand.hbm [shape: f32[2,256,128], index: 0, kind: input, shape index: {}]
  %s1 = inlined_call_operand.hbm [shape: f32[128,128], index: 1, kind: input, shape index: {}]
  %s2 = inlined_call_operand.hbm [shape: f32[1,128], index: 2, kind: input, shape index: {}]
  %s3 = inlined_call_operand.hbm [shape: f32[2,256,128], index: 3, kind: output, shape index: {}]
  %s4 = sld [smem:[#allocation0]]
  $region57: #{tpu_custom_call.1} parent=0
    _
  %s6 = ssub.s32 1, %s4
  %s7 = scalar_select 0, %s6, %s4
  $region1: #{tpu_custom_call.1} parent=0
    #allocation2 [shape = 'u8[262144]{0}', space=vmem, size = 0x40000, scoped, tag = 'input window, operand 0']
    #allocation3 [shape = 's32[2]{0}', space=sflag, size = 0x8, scoped, tag = 'scoped memory for tpu_custom_call.1']
    #allocation4 [shape = 's32[2]{0}', space=sflag, size = 0x8, scoped, tag = 'scoped memory for tpu_custom_call.1']
    #allocation5 [shape = 'u8[65536]{0}', space=vmem, size = 0x10000, scoped, tag = 'input window, operand 1, single buffered']
    #allocation6 [shape = 's32[1]{0}', space=sflag, size = 0x4, scoped, tag = 'scoped memory for tpu_custom_call.1']
    #allocation7 [shape = 'u8[512]{0}', space=vmem, size = 0x400, scoped, tag = 'input window, operand 2, single buffered']
    #allocation8 [shape = 'u8[262144]{0}', space=vmem, size = 0x40000, scoped, tag = 'output window, operand 0']
    %8 = vsyncpa [#allocation3], 0
    %s9 = scalar_lea.sflag [#allocation3], 1
    %10 = vsyncpa %s9, 0
    %11 = vsyncpa [#allocation6], 0
    %12 = vsyncpa [#allocation4], 0
    %s13 = scalar_lea.sflag [#allocation4], 1
    %14 = vsyncpa %s13, 0
    loop: start=0, step=1, limit=4
    $region2: #{tpu_custom_call.1} parent=1 // loop_pre_header
      _
    $region3: #{tpu_custom_call.1} parent=1 // loop_header
      %s16 = sphi 0, %s20
      %p17 = scmp.ge.s32.totalorder %s16, 4
      %s23 = sphi 0, %s35
      %s24 = sphi 0, %s31
      %s25 = sphi 0, %s23
      %s26 = sphi 0, %s24
      %s27 = sphi 0, %s25
      %s28 = sphi 0, %s26
      %s40 = sphi 0, %s42
      %s43 = sphi 0, %s40
      %s44 = sphi 0, %s43
      %s60 = sphi 0, %s44
      %s64 = sphi 0, %s64
      %s66 = sphi 0, %s64
      %s67 = sphi 0, %s66
      %s81 = sphi 0, %s67
      %s85 = sphi 0, %s85
      %s87 = sphi 0, %s85
      %s88 = sphi 0, %s87
      %s102 = sphi 0, %s88
      %s110 = sphi 0, %s112
      %s113 = sphi 0, %s110
      %s114 = sphi 0, %s113
      %s130 = sphi 0, %s114
    $region4: #{tpu_custom_call.1} parent=1 // loop_header_branch
      %19 = sbr.rel (%p17) target = $region8
    $region5: #{tpu_custom_call.1} parent=1 // loop_body
      %s21 = ssub.s32 %s16, 1
      %s22 = ssub.s32 %s16, 2
      %s29 = sadd.s32 1, %s24
      %p30 = scmp.ge.s32.totalorder %s29, 1
      %s31 = scalar_select %p30, 0, %s29
      %s32 = sadd.s32 1, %s23
      %s33 = scalar_select %p30, %s32, %s23
      %p34 = scmp.ge.s32.totalorder %s33, 2
      %s35 = scalar_select %p34, 0, %s33
      %s36 = ssub.s32 %s23, %s35
      %s37 = ssub.s32 %s24, %s31
      %s38 = sor.u32 %s36, %s37
      %p39 = scmp.eq.s32.totalorder %s38, 0
      %s41 = sadd.s32 %s40, 1
      %s42 = scalar_select %p39, %s40, %s41
      %p45 = pneg %p39
      %p46 = scmp.eq.s32.totalorder %s16, 1
      %p47 = por %p45, %p46
      %p48 = scmp.ne.s32.totalorder %s40, %s43
      %p49 = scmp.eq.s32.totalorder %s16, 0
      %p50 = por %p48, %p49
      %p51 = scmp.ne.s32.totalorder %s40, %s43
      %p52 = scmp.eq.s32.totalorder %s21, 1
      %p53 = por %p51, %p52
      %p54 = scmp.ne.s32.totalorder %s43, %s44
      %p55 = scmp.eq.s32.totalorder %s21, 0
      %p56 = por %p54, %p55
      %p57 = scmp.ne.s32.totalorder %s43, %s44
      %p58 = scmp.eq.s32.totalorder %s22, 1
      %p59 = por %p57, %p58
      %p61 = scmp.ne.s32.totalorder %s44, %s60
      %p62 = scmp.eq.s32.totalorder %s22, 0
      %p63 = por %p61, %p62
      %s65 = sadd.s32 %s64, 1
      %p68 = scmp.eq.s32.totalorder %s16, 1
      %p69 = scmp.ne.s32.totalorder %s64, %s66
      %p70 = scmp.eq.s32.totalorder %s16, 0
      %p71 = por %p69, %p70
      %p72 = scmp.ne.s32.totalorder %s64, %s66
      %p73 = scmp.eq.s32.totalorder %s21, 1
      %p74 = por %p72, %p73
      %p75 = scmp.ne.s32.totalorder %s66, %s67
      %p76 = scmp.eq.s32.totalorder %s21, 0
      %p77 = por %p75, %p76
      %p78 = scmp.ne.s32.totalorder %s66, %s67
      %p79 = scmp.eq.s32.totalorder %s22, 1
      %p80 = por %p78, %p79
      %p82 = scmp.ne.s32.totalorder %s67, %s81
      %p83 = scmp.eq.s32.totalorder %s22, 0
      %p84 = por %p82, %p83
      %s86 = sadd.s32 %s85, 1
      %p89 = scmp.eq.s32.totalorder %s16, 1
      %p90 = scmp.ne.s32.totalorder %s85, %s87
      %p91 = scmp.eq.s32.totalorder %s16, 0
      %p92 = por %p90, %p91
      %p93 = scmp.ne.s32.totalorder %s85, %s87
      %p94 = scmp.eq.s32.totalorder %s21, 1
      %p95 = por %p93, %p94
      %p96 = scmp.ne.s32.totalorder %s87, %s88
      %p97 = scmp.eq.s32.totalorder %s21, 0
      %p98 = por %p96, %p97
      %p99 = scmp.ne.s32.totalorder %s87, %s88
      %p100 = scmp.eq.s32.totalorder %s22, 1
      %p101 = por %p99, %p100
      %p103 = scmp.ne.s32.totalorder %s88, %s102
      %p104 = scmp.eq.s32.totalorder %s22, 0
      %p105 = por %p103, %p104
      %s106 = ssub.s32 %s23, %s35
      %s107 = ssub.s32 %s24, %s31
      %s108 = sor.u32 %s106, %s107
      %p109 = scmp.eq.s32.totalorder %s108, 0
      %s111 = sadd.s32 %s110, 1
      %s112 = scalar_select %p109, %s110, %s111
      %p115 = pneg %p109
      %p116 = scmp.eq.s32.totalorder %s16, 1
      %p117 = por %p115, %p116
      %p118 = scmp.ne.s32.totalorder %s110, %s113
      %p119 = scmp.eq.s32.totalorder %s16, 0
      %p120 = por %p118, %p119
      %p121 = scmp.ne.s32.totalorder %s110, %s113
      %p122 = scmp.eq.s32.totalorder %s21, 1
      %p123 = por %p121, %p122
      %p124 = scmp.ne.s32.totalorder %s113, %s114
      %p125 = scmp.eq.s32.totalorder %s21, 0
      %p126 = por %p124, %p125
      %p127 = scmp.ne.s32.totalorder %s113, %s114
      %p128 = scmp.eq.s32.totalorder %s22, 1
      %p129 = por %p127, %p128
      %p131 = scmp.ne.s32.totalorder %s114, %s130
      %p132 = scmp.eq.s32.totalorder %s22, 0
      %p133 = por %p131, %p132
      %p134 = scmp.le.s32.totalorder 1, %s16
      %p135 = scmp.lt.s32.totalorder %s16, 3
      %p136 = pnand %p134, %p135
      %p137 = pneg %p136
      // Predicated region
      $region9: #{tpu_custom_call.1} parent=5 // pred_check
        _
      $region10: #{tpu_custom_call.1} parent=5 // pred_check_branch
        %139 = sbr.rel (%p136) target = $region12
      $region11: #{tpu_custom_call.1} parent=5 // pred_region
        %s140 = ssub.s32 %s16, 1
        // Predicated region
        $region13: #{tpu_custom_call.1} parent=11 // pred_check
          %p141 = pneg %p77
        $region14: #{tpu_custom_call.1} parent=11 // pred_check_branch
          %143 = sbr.rel (%p141) target = $region16
        $region15: #{tpu_custom_call.1} parent=11 // pred_region
          %s145 = ssub.s32 2048, 2048
          %146 = vsyncadd [#allocation6], %s145
          %s147 = sshll.u32 [#allocation5], 4
          %s148 = int_to_ptr.vmem [resolvable:$true] %s147
          %153 = dma.hbm_to_vmem [thread:$0]  %s1, 2048, %s148, [#allocation6], 128, 128, 8
        $region16: #{tpu_custom_call.1} parent=11 // pred_fallthru
          _
        // Predicated region
        $region17: #{tpu_custom_call.1} parent=11 // pred_check
          %p154 = pneg %p98
        $region18: #{tpu_custom_call.1} parent=11 // pred_check_branch
          %156 = sbr.rel (%p154) target = $region20
        $region19: #{tpu_custom_call.1} parent=11 // pred_region
          %s158 = ssub.s32 16, 16
          %159 = vsyncadd [#allocation6], %s158
          %s161 = sshll.u32 [#allocation7], 4
          %s162 = int_to_ptr.vmem [resolvable:$true] %s161
          %164 = dma.hbm_to_vmem [thread:$0]  %s2, 16, %s162, [#allocation6]
        $region20: #{tpu_custom_call.1} parent=11 // pred_fallthru
          _
      $region12: #{tpu_custom_call.1} parent=5 // pred_fallthru
        _
      %p165 = scmp.lt.s32.totalorder %s16, 2
      // Predicated region
      $region21: #{tpu_custom_call.1} parent=5 // pred_check
        %p166 = pneg %p165
      $region22: #{tpu_custom_call.1} parent=5 // pred_check_branch
        %168 = sbr.rel (%p166) target = $region24
      $region23: #{tpu_custom_call.1} parent=5 // pred_region
        // Predicated region
        $region25: #{tpu_custom_call.1} parent=23 // pred_check
          %p169 = pneg %p50
        $region26: #{tpu_custom_call.1} parent=23 // pred_check_branch
          %171 = sbr.rel (%p169) target = $region28
        $region27: #{tpu_custom_call.1} parent=23 // pred_region
          %s172 = sand.u32 %s40, 1
          %s173 = scalar_lea.sflag [#allocation3], %s172
          %s174 = sand.u32 %s40, 1
          %s175 = smul.addr %s174, 256
          %s176 = scalar_lea.vmem [#allocation2], %s175
          %s177 = smul.u32 32, %s24
          %s179 = ssub.s32 4096, 4096
          %180 = vsyncadd %s173, %s179
          %s181 = smul.addr %s23, 32
          %s182 = sadd.s32 %s177, %s181
          %s183 = smul.addr %s182, 128
          %s184 = scalar_lea.hbm %s0, %s183
          %s185 = sshll.u32 %s176, 4
          %s186 = int_to_ptr.vmem [resolvable:$true] %s185
          %191 = dma.hbm_to_vmem [thread:$0]  %s184, 4096, %s186, %s173, 128, 128, 8
        $region28: #{tpu_custom_call.1} parent=23 // pred_fallthru
          _
      $region24: #{tpu_custom_call.1} parent=5 // pred_fallthru
        _
      %p192 = scmp.le.s32.totalorder 1, %s16
      %p193 = scmp.lt.s32.totalorder %s16, 3
      %p194 = pnand %p192, %p193
      %p195 = pneg %p194
      // Predicated region
      $region29: #{tpu_custom_call.1} parent=5 // pred_check
        _
      $region30: #{tpu_custom_call.1} parent=5 // pred_check_branch
        %197 = sbr.rel (%p194) target = $region32
      $region31: #{tpu_custom_call.1} parent=5 // pred_region
        %s198 = ssub.s32 %s16, 1
        %s199 = sand.u32 %s43, 1
        %s200 = scalar_lea.sflag [#allocation3], %s199
        %s201 = sand.u32 %s43, 1
        %s202 = smul.addr %s201, 256
        %s203 = scalar_lea.vmem [#allocation2], %s202
        // Predicated region
        $region33: #{tpu_custom_call.1} parent=31 // pred_check
          %p204 = pneg %p56
        $region34: #{tpu_custom_call.1} parent=31 // pred_check_branch
          %206 = sbr.rel (%p204) target = $region36
        $region35: #{tpu_custom_call.1} parent=31 // pred_region
          %207 = dma.done %s200, 4096
        $region36: #{tpu_custom_call.1} parent=31 // pred_fallthru
          _
        // Predicated region
        $region37: #{tpu_custom_call.1} parent=31 // pred_check
          %p208 = pneg %p77
        $region38: #{tpu_custom_call.1} parent=31 // pred_check_branch
          %210 = sbr.rel (%p208) target = $region40
        $region39: #{tpu_custom_call.1} parent=31 // pred_region
          %211 = dma.done [#allocation6], 2048
        $region40: #{tpu_custom_call.1} parent=31 // pred_fallthru
          _
        // Predicated region
        $region41: #{tpu_custom_call.1} parent=31 // pred_check
          %p212 = pneg %p98
        $region42: #{tpu_custom_call.1} parent=31 // pred_check_branch
          %214 = sbr.rel (%p212) target = $region44
        $region43: #{tpu_custom_call.1} parent=31 // pred_region
          %215 = dma.done [#allocation6], 16
        $region44: #{tpu_custom_call.1} parent=31 // pred_fallthru
          _
        %s216 = sand.u32 %s43, 1
        %s217 = scalar_lea.sflag [#allocation3], %s216
        %s218 = sand.u32 %s43, 1
        %s219 = smul.addr %s218, 256
        %s220 = scalar_lea.vmem [#allocation2], %s219
        %p221 = pneg %p56
        %p222 = pneg %p53
        %p223 = pneg %p77
        %p224 = pneg %p74
        %p225 = pneg %p98
        %p226 = pneg %p95
        %p227 = pneg %p126
        %p228 = pneg %p123
        %s229 = sand.u32 %s113, 1
        %s230 = scalar_lea.sflag [#allocation4], %s229
        %s231 = sand.u32 %s113, 1
        %s232 = smul.addr %s231, 256
        %s233 = scalar_lea.vmem [#allocation8], %s232
        %s234 = smul.u32 32, %s26
        %s235 = smul.u32 32, %s26
        %v236 = vld [vmem:[%s203] sm:$0xff]
        %v237 = vld [vmem:[%s203 + $0x8] sm:$0xff]
        %v238 = vld [vmem:[%s203 + $0x10] sm:$0xff]
        %v239 = vld [vmem:[%s203 + $0x18] sm:$0xff]
        %v240 = vld [vmem:[%s203 + $0x20] sm:$0xff]
        %v241 = vld [vmem:[%s203 + $0x28] sm:$0xff]
        %v242 = vld [vmem:[%s203 + $0x30] sm:$0xff]
        %v243 = vld [vmem:[%s203 + $0x38] sm:$0xff]
        %v244 = vld [vmem:[%s203 + $0x40] sm:$0xff]
        %v245 = vld [vmem:[%s203 + $0x48] sm:$0xff]
        %v246 = vld [vmem:[%s203 + $0x50] sm:$0xff]
        %v247 = vld [vmem:[%s203 + $0x58] sm:$0xff]
        %v248 = vld [vmem:[%s203 + $0x60] sm:$0xff]
        %v249 = vld [vmem:[%s203 + $0x68] sm:$0xff]
        %v250 = vld [vmem:[%s203 + $0x70] sm:$0xff]
        %v251 = vld [vmem:[%s203 + $0x78] sm:$0xff]
        %v252 = vld [vmem:[%s203 + $0x80] sm:$0xff]
        %v253 = vld [vmem:[%s203 + $0x88] sm:$0xff]
        %v254 = vld [vmem:[%s203 + $0x90] sm:$0xff]
        %v255 = vld [vmem:[%s203 + $0x98] sm:$0xff]
        %v256 = vld [vmem:[%s203 + $0xa0] sm:$0xff]
        %v257 = vld [vmem:[%s203 + $0xa8] sm:$0xff]
        %v258 = vld [vmem:[%s203 + $0xb0] sm:$0xff]
        %v259 = vld [vmem:[%s203 + $0xb8] sm:$0xff]
        %v260 = vld [vmem:[%s203 + $0xc0] sm:$0xff]
        %v261 = vld [vmem:[%s203 + $0xc8] sm:$0xff]
        %v262 = vld [vmem:[%s203 + $0xd0] sm:$0xff]
        %v263 = vld [vmem:[%s203 + $0xd8] sm:$0xff]
        %v264 = vld [vmem:[%s203 + $0xe0] sm:$0xff]
        %v265 = vld [vmem:[%s203 + $0xe8] sm:$0xff]
        %v266 = vld [vmem:[%s203 + $0xf0] sm:$0xff]
        %v267 = vld [vmem:[%s203 + $0xf8] sm:$0xff]
        %v268 = vld [vmem:[#allocation5] sm:$0xff]
        %v269 = vld [vmem:[#allocation5 + $0x8] sm:$0xff]
        %v270 = vld [vmem:[#allocation5 + $0x10] sm:$0xff]
        %v271 = vld [vmem:[#allocation5 + $0x18] sm:$0xff]
        %v272 = vld [vmem:[#allocation5 + $0x20] sm:$0xff]
        %v273 = vld [vmem:[#allocation5 + $0x28] sm:$0xff]
        %v274 = vld [vmem:[#allocation5 + $0x30] sm:$0xff]
        %v275 = vld [vmem:[#allocation5 + $0x38] sm:$0xff]
        %v276 = vld [vmem:[#allocation5 + $0x40] sm:$0xff]
        %v277 = vld [vmem:[#allocation5 + $0x48] sm:$0xff]
        %v278 = vld [vmem:[#allocation5 + $0x50] sm:$0xff]
        %v279 = vld [vmem:[#allocation5 + $0x58] sm:$0xff]
        %v280 = vld [vmem:[#allocation5 + $0x60] sm:$0xff]
        %v281 = vld [vmem:[#allocation5 + $0x68] sm:$0xff]
        %v282 = vld [vmem:[#allocation5 + $0x70] sm:$0xff]
        %v283 = vld [vmem:[#allocation5 + $0x78] sm:$0xff]
        %v284 = vld [vmem:[#allocation7] sm:$0x1]
        %v286 = vlaneseq
        %v287 = vshrl.u32 %v286, 7
        %v288 = vsub.s32 0, %v287
        %v289 = vrot.slane %v284, %v288
        %291 = vmatprep.subr.mxu0 0.0
        %292 = vmatpush1.msra.mxu0 %v268
        %293 = vmatprep.subr.mxu0 0.0
        %294 = vmatpush1.msra.mxu0 %v269
        %295 = vmatprep.subr.mxu0 0.0
        %296 = vmatpush1.msra.mxu0 %v270
        %297 = vmatprep.subr.mxu0 0.0
        %298 = vmatpush1.msra.mxu0 %v271
        %299 = vmatprep.subr.mxu0 0.0
        %300 = vmatpush1.msra.mxu0 %v272
        %301 = vmatprep.subr.mxu0 0.0
        %302 = vmatpush1.msra.mxu0 %v273
        %303 = vmatprep.subr.mxu0 0.0
        %304 = vmatpush1.msra.mxu0 %v274
        %305 = vmatprep.subr.mxu0 0.0
        %306 = vmatpush1.msra.mxu0 %v275
        %307 = vmatprep.subr.mxu0 0.0
        %308 = vmatpush1.msra.mxu0 %v276
        %309 = vmatprep.subr.mxu0 0.0
        %310 = vmatpush1.msra.mxu0 %v277
        %311 = vmatprep.subr.mxu0 0.0
        %312 = vmatpush1.msra.mxu0 %v278
        %313 = vmatprep.subr.mxu0 0.0
        %314 = vmatpush1.msra.mxu0 %v279
        %315 = vmatprep.subr.mxu0 0.0
        %316 = vmatpush1.msra.mxu0 %v280
        %317 = vmatprep.subr.mxu0 0.0
        %318 = vmatpush1.msra.mxu0 %v281
        %319 = vmatprep.subr.mxu0 0.0
        %320 = vmatpush1.msra.mxu0 %v282
        %321 = vmatprep.subr.mxu0 0.0
        %322 = vmatpush1.msra.mxu0 %v283
        %323 = vmatprep.subr.mxu0 0.0
        %324 = vmatpush1.msra.mxu0 0.0
        %325 = vmatprep.subr.mxu0 0.0
        %326 = vmatpush1.msra.mxu0 0.0
        %327 = vmatprep.subr.mxu0 0.0
        %328 = vmatpush1.msra.mxu0 0.0
        %329 = vmatprep.subr.mxu0 0.0
        %330 = vmatpush1.msra.mxu0 0.0
        %331 = vmatprep.subr.mxu0 0.0
        %332 = vmatpush1.msra.mxu0 0.0
        %333 = vmatprep.subr.mxu0 0.0
        %334 = vmatpush1.msra.mxu0 0.0
        %335 = vmatprep.subr.mxu0 0.0
        %336 = vmatpush1.msra.mxu0 0.0
        %337 = vmatprep.subr.mxu0 0.0
        %338 = vmatpush1.msra.mxu0 0.0
        %339 = vmatprep.subr.mxu0 0.0
        %340 = vmatpush1.msra.mxu0 0.0
        %341 = vmatprep.subr.mxu0 0.0
        %342 = vmatpush1.msra.mxu0 0.0
        %343 = vmatprep.subr.mxu0 0.0
        %344 = vmatpush1.msra.mxu0 0.0
        %345 = vmatprep.subr.mxu0 0.0
        %346 = vmatpush1.msra.mxu0 0.0
        %347 = vmatprep.subr.mxu0 0.0
        %348 = vmatpush1.msra.mxu0 0.0
        %349 = vmatprep.subr.mxu0 0.0
        %350 = vmatpush1.msra.mxu0 0.0
        %351 = vmatprep.subr.mxu0 0.0
        %352 = vmatpush1.msra.mxu0 0.0
        %353 = vmatprep.subr.mxu0 0.0
        %354 = vmatpush1.msra.mxu0 0.0
        %355 = vmatprep.mubr.f32.mxu0 0.0
        %356 = vmatmul.mubr.f32.gmra.mrb[0].mxu0 %v236
        %v357 = vpop.f32.mrb[0].mxu0
        %v358 = vadd.f32 %v289, %v357
        %v359 = vpop.f32.mrb[0].mxu0
        %360 = vmatprep.mubr.f32.mxu0 0.0
        %361 = vmatmul.mubr.f32.gmra.mrb[0].mxu0 %v237
        %v362 = vpop.f32.mrb[0].mxu0
        %v363 = vadd.f32 %v289, %v362
        %v364 = vpop.f32.mrb[0].mxu0
        %365 = vmatprep.mubr.f32.mxu0 0.0
        %366 = vmatmul.mubr.f32.gmra.mrb[0].mxu0 %v238
        %v367 = vpop.f32.mrb[0].mxu0
        %v368 = vadd.f32 %v289, %v367
        %v369 = vpop.f32.mrb[0].mxu0
        %370 = vmatprep.mubr.f32.mxu0 0.0
        %371 = vmatmul.mubr.f32.gmra.mrb[0].mxu0 %v239
        %v372 = vpop.f32.mrb[0].mxu0
        %v373 = vadd.f32 %v289, %v372
        %v374 = vpop.f32.mrb[0].mxu0
        %375 = vmatprep.mubr.f32.mxu0 0.0
        %376 = vmatmul.mubr.f32.gmra.mrb[0].mxu0 %v240
        %v377 = vpop.f32.mrb[0].mxu0
        %v378 = vadd.f32 %v289, %v377
        %v379 = vpop.f32.mrb[0].mxu0
        %380 = vmatprep.mubr.f32.mxu0 0.0
        %381 = vmatmul.mubr.f32.gmra.mrb[0].mxu0 %v241
        %v382 = vpop.f32.mrb[0].mxu0
        %v383 = vadd.f32 %v289, %v382
        %v384 = vpop.f32.mrb[0].mxu0
        %385 = vmatprep.mubr.f32.mxu0 0.0
        %386 = vmatmul.mubr.f32.gmra.mrb[0].mxu0 %v242
        %v387 = vpop.f32.mrb[0].mxu0
        %v388 = vadd.f32 %v289, %v387
        %v389 = vpop.f32.mrb[0].mxu0
        %390 = vmatprep.mubr.f32.mxu0 0.0
        %391 = vmatmul.mubr.f32.gmra.mrb[0].mxu0 %v243
        %v392 = vpop.f32.mrb[0].mxu0
        %v393 = vadd.f32 %v289, %v392
        %v394 = vpop.f32.mrb[0].mxu0
        %395 = vmatprep.mubr.f32.mxu0 0.0
        %396 = vmatmul.mubr.f32.gmra.mrb[0].mxu0 %v244
        %v397 = vpop.f32.mrb[0].mxu0
        %v398 = vadd.f32 %v289, %v397
        %v399 = vpop.f32.mrb[0].mxu0
        %400 = vmatprep.mubr.f32.mxu0 0.0
        %401 = vmatmul.mubr.f32.gmra.mrb[0].mxu0 %v245
        %v402 = vpop.f32.mrb[0].mxu0
        %v403 = vadd.f32 %v289, %v402
        %v404 = vpop.f32.mrb[0].mxu0
        %405 = vmatprep.mubr.f32.mxu0 0.0
        %406 = vmatmul.mubr.f32.gmra.mrb[0].mxu0 %v246
        %v407 = vpop.f32.mrb[0].mxu0
        %v408 = vadd.f32 %v289, %v407
        %v409 = vpop.f32.mrb[0].mxu0
        %410 = vmatprep.mubr.f32.mxu0 0.0
        %411 = vmatmul.mubr.f32.gmra.mrb[0].mxu0 %v247
        %v412 = vpop.f32.mrb[0].mxu0
        %v413 = vadd.f32 %v289, %v412
        %v414 = vpop.f32.mrb[0].mxu0
        %415 = vmatprep.mubr.f32.mxu0 0.0
        %416 = vmatmul.mubr.f32.gmra.mrb[0].mxu0 %v248
        %v417 = vpop.f32.mrb[0].mxu0
        %v418 = vadd.f32 %v289, %v417
        %v419 = vpop.f32.mrb[0].mxu0
        %420 = vmatprep.mubr.f32.mxu0 0.0
        %421 = vmatmul.mubr.f32.gmra.mrb[0].mxu0 %v249
        %v422 = vpop.f32.mrb[0].mxu0
        %v423 = vadd.f32 %v289, %v422
        %v424 = vpop.f32.mrb[0].mxu0
        %425 = vmatprep.mubr.f32.mxu0 0.0
        %426 = vmatmul.mubr.f32.gmra.mrb[0].mxu0 %v250
        %v427 = vpop.f32.mrb[0].mxu0
        %v428 = vadd.f32 %v289, %v427
        %v429 = vpop.f32.mrb[0].mxu0
        %430 = vmatprep.mubr.f32.mxu0 0.0
        %431 = vmatmul.mubr.f32.gmra.mrb[0].mxu0 %v251
        %v432 = vpop.f32.mrb[0].mxu0
        %v433 = vadd.f32 %v289, %v432
        %v434 = vpop.f32.mrb[0].mxu0
        %435 = vmatprep.mubr.f32.mxu0 0.0
        %436 = vmatmul.mubr.f32.gmra.mrb[0].mxu0 %v252
        %v437 = vpop.f32.mrb[0].mxu0
        %v438 = vadd.f32 %v289, %v437
        %v439 = vpop.f32.mrb[0].mxu0
        %440 = vmatprep.mubr.f32.mxu0 0.0
        %441 = vmatmul.mubr.f32.gmra.mrb[0].mxu0 %v253
        %v442 = vpop.f32.mrb[0].mxu0
        %v443 = vadd.f32 %v289, %v442
        %v444 = vpop.f32.mrb[0].mxu0
        %445 = vmatprep.mubr.f32.mxu0 0.0
        %446 = vmatmul.mubr.f32.gmra.mrb[0].mxu0 %v254
        %v447 = vpop.f32.mrb[0].mxu0
        %v448 = vadd.f32 %v289, %v447
        %v449 = vpop.f32.mrb[0].mxu0
        %450 = vmatprep.mubr.f32.mxu0 0.0
        %451 = vmatmul.mubr.f32.gmra.mrb[0].mxu0 %v255
        %v452 = vpop.f32.mrb[0].mxu0
        %v453 = vadd.f32 %v289, %v452
        %v454 = vpop.f32.mrb[0].mxu0
        %455 = vmatprep.mubr.f32.mxu0 0.0
        %456 = vmatmul.mubr.f32.gmra.mrb[0].mxu0 %v256
        %v457 = vpop.f32.mrb[0].mxu0
        %v458 = vadd.f32 %v289, %v457
        %v459 = vpop.f32.mrb[0].mxu0
        %460 = vmatprep.mubr.f32.mxu0 0.0
        %461 = vmatmul.mubr.f32.gmra.mrb[0].mxu0 %v257
        %v462 = vpop.f32.mrb[0].mxu0
        %v463 = vadd.f32 %v289, %v462
        %v464 = vpop.f32.mrb[0].mxu0
        %465 = vmatprep.mubr.f32.mxu0 0.0
        %466 = vmatmul.mubr.f32.gmra.mrb[0].mxu0 %v258
        %v467 = vpop.f32.mrb[0].mxu0
        %v468 = vadd.f32 %v289, %v467
        %v469 = vpop.f32.mrb[0].mxu0
        %470 = vmatprep.mubr.f32.mxu0 0.0
        %471 = vmatmul.mubr.f32.gmra.mrb[0].mxu0 %v259
        %v472 = vpop.f32.mrb[0].mxu0
        %v473 = vadd.f32 %v289, %v472
        %v474 = vpop.f32.mrb[0].mxu0
        %475 = vmatprep.mubr.f32.mxu0 0.0
        %476 = vmatmul.mubr.f32.gmra.mrb[0].mxu0 %v260
        %v477 = vpop.f32.mrb[0].mxu0
        %v478 = vadd.f32 %v289, %v477
        %v479 = vpop.f32.mrb[0].mxu0
        %480 = vmatprep.mubr.f32.mxu0 0.0
        %481 = vmatmul.mubr.f32.gmra.mrb[0].mxu0 %v261
        %v482 = vpop.f32.mrb[0].mxu0
        %v483 = vadd.f32 %v289, %v482
        %v484 = vpop.f32.mrb[0].mxu0
        %485 = vmatprep.mubr.f32.mxu0 0.0
        %486 = vmatmul.mubr.f32.gmra.mrb[0].mxu0 %v262
        %v487 = vpop.f32.mrb[0].mxu0
        %v488 = vadd.f32 %v289, %v487
        %v489 = vpop.f32.mrb[0].mxu0
        %490 = vmatprep.mubr.f32.mxu0 0.0
        %491 = vmatmul.mubr.f32.gmra.mrb[0].mxu0 %v263
        %v492 = vpop.f32.mrb[0].mxu0
        %v493 = vadd.f32 %v289, %v492
        %v494 = vpop.f32.mrb[0].mxu0
        %495 = vmatprep.mubr.f32.mxu0 0.0
        %496 = vmatmul.mubr.f32.gmra.mrb[0].mxu0 %v264
        %v497 = vpop.f32.mrb[0].mxu0
        %v498 = vadd.f32 %v289, %v497
        %v499 = vpop.f32.mrb[0].mxu0
        %500 = vmatprep.mubr.f32.mxu0 0.0
        %501 = vmatmul.mubr.f32.gmra.mrb[0].mxu0 %v265
        %v502 = vpop.f32.mrb[0].mxu0
        %v503 = vadd.f32 %v289, %v502
        %v504 = vpop.f32.mrb[0].mxu0
        %505 = vmatprep.mubr.f32.mxu0 0.0
        %506 = vmatmul.mubr.f32.gmra.mrb[0].mxu0 %v266
        %v507 = vpop.f32.mrb[0].mxu0
        %v508 = vadd.f32 %v289, %v507
        %v509 = vpop.f32.mrb[0].mxu0
        %510 = vmatprep.mubr.f32.mxu0 0.0
        %511 = vmatmul.mubr.f32.gmra.mrb[0].mxu0 %v267
        %v512 = vpop.f32.mrb[0].mxu0
        %v513 = vadd.f32 %v289, %v512
        %v514 = vpop.f32.mrb[0].mxu0
        %515 = vdwg.mxu0
        %v516 = vmax.f32 %v358, 0.0
        %v517 = vmax.f32 %v363, 0.0
        %v518 = vmax.f32 %v368, 0.0
        %v519 = vmax.f32 %v373, 0.0
        %v520 = vmax.f32 %v378, 0.0
        %v521 = vmax.f32 %v383, 0.0
        %v522 = vmax.f32 %v388, 0.0
        %v523 = vmax.f32 %v393, 0.0
        %v524 = vmax.f32 %v398, 0.0
        %v525 = vmax.f32 %v403, 0.0
        %v526 = vmax.f32 %v408, 0.0
        %v527 = vmax.f32 %v413, 0.0
        %v528 = vmax.f32 %v418, 0.0
        %v529 = vmax.f32 %v423, 0.0
        %v530 = vmax.f32 %v428, 0.0
        %v531 = vmax.f32 %v433, 0.0
        %v532 = vmax.f32 %v438, 0.0
        %v533 = vmax.f32 %v443, 0.0
        %v534 = vmax.f32 %v448, 0.0
        %v535 = vmax.f32 %v453, 0.0
        %v536 = vmax.f32 %v458, 0.0
        %v537 = vmax.f32 %v463, 0.0
        %v538 = vmax.f32 %v468, 0.0
        %v539 = vmax.f32 %v473, 0.0
        %v540 = vmax.f32 %v478, 0.0
        %v541 = vmax.f32 %v483, 0.0
        %v542 = vmax.f32 %v488, 0.0
        %v543 = vmax.f32 %v493, 0.0
        %v544 = vmax.f32 %v498, 0.0
        %v545 = vmax.f32 %v503, 0.0
        %v546 = vmax.f32 %v508, 0.0
        %v547 = vmax.f32 %v513, 0.0
        %548 = vst [vmem:[%s233] sm:$0xff] %v516
        %549 = vst [vmem:[%s233 + $0x8] sm:$0xff] %v517
        %550 = vst [vmem:[%s233 + $0x10] sm:$0xff] %v518
        %551 = vst [vmem:[%s233 + $0x18] sm:$0xff] %v519
        %552 = vst [vmem:[%s233 + $0x20] sm:$0xff] %v520
        %553 = vst [vmem:[%s233 + $0x28] sm:$0xff] %v521
        %554 = vst [vmem:[%s233 + $0x30] sm:$0xff] %v522
        %555 = vst [vmem:[%s233 + $0x38] sm:$0xff] %v523
        %556 = vst [vmem:[%s233 + $0x40] sm:$0xff] %v524
        %557 = vst [vmem:[%s233 + $0x48] sm:$0xff] %v525
        %558 = vst [vmem:[%s233 + $0x50] sm:$0xff] %v526
        %559 = vst [vmem:[%s233 + $0x58] sm:$0xff] %v527
        %560 = vst [vmem:[%s233 + $0x60] sm:$0xff] %v528
        %561 = vst [vmem:[%s233 + $0x68] sm:$0xff] %v529
        %562 = vst [vmem:[%s233 + $0x70] sm:$0xff] %v530
        %563 = vst [vmem:[%s233 + $0x78] sm:$0xff] %v531
        %564 = vst [vmem:[%s233 + $0x80] sm:$0xff] %v532
        %565 = vst [vmem:[%s233 + $0x88] sm:$0xff] %v533
        %566 = vst [vmem:[%s233 + $0x90] sm:$0xff] %v534
        %567 = vst [vmem:[%s233 + $0x98] sm:$0xff] %v535
        %568 = vst [vmem:[%s233 + $0xa0] sm:$0xff] %v536
        %569 = vst [vmem:[%s233 + $0xa8] sm:$0xff] %v537
        %570 = vst [vmem:[%s233 + $0xb0] sm:$0xff] %v538
        %571 = vst [vmem:[%s233 + $0xb8] sm:$0xff] %v539
        %572 = vst [vmem:[%s233 + $0xc0] sm:$0xff] %v540
        %573 = vst [vmem:[%s233 + $0xc8] sm:$0xff] %v541
        %574 = vst [vmem:[%s233 + $0xd0] sm:$0xff] %v542
        %575 = vst [vmem:[%s233 + $0xd8] sm:$0xff] %v543
        %576 = vst [vmem:[%s233 + $0xe0] sm:$0xff] %v544
        %577 = vst [vmem:[%s233 + $0xe8] sm:$0xff] %v545
        %578 = vst [vmem:[%s233 + $0xf0] sm:$0xff] %v546
        %579 = vst [vmem:[%s233 + $0xf8] sm:$0xff] %v547
        %s580 = sand.u32 %s113, 1
        %s581 = scalar_lea.sflag [#allocation4], %s580
        %s582 = sand.u32 %s113, 1
        %s583 = smul.addr %s582, 256
        %s584 = scalar_lea.vmem [#allocation8], %s583
        // Predicated region
        $region45: #{tpu_custom_call.1} parent=31 // pred_check
          %p585 = pneg %p123
        $region46: #{tpu_custom_call.1} parent=31 // pred_check_branch
          %587 = sbr.rel (%p585) target = $region48
        $region47: #{tpu_custom_call.1} parent=31 // pred_region
          %s588 = smul.u32 32, %s26
          %s590 = ssub.s32 4096, 4096
          %591 = vsyncadd %s581, %s590
          %s592 = smul.addr %s25, 32
          %s593 = sadd.s32 %s588, %s592
          %s594 = smul.addr %s593, 128
          %s595 = scalar_lea.hbm %s3, %s594
          %s596 = sshll.u32 %s584, 4
          %s597 = int_to_ptr.vmem [resolvable:$true] %s596
          %602 = dma.vmem_to_hbm [thread:$0]  %s597, 4096, %s595, %s581, 128, 128, 8
        $region48: #{tpu_custom_call.1} parent=31 // pred_fallthru
          _
      $region32: #{tpu_custom_call.1} parent=5 // pred_fallthru
        _
      %p603 = scmp.le.s32.totalorder 2, %s16
      // Predicated region
      $region49: #{tpu_custom_call.1} parent=5 // pred_check
        %p604 = pneg %p603
      $region50: #{tpu_custom_call.1} parent=5 // pred_check_branch
        %606 = sbr.rel (%p604) target = $region52
      $region51: #{tpu_custom_call.1} parent=5 // pred_region
        %s607 = ssub.s32 %s16, 2
        // Predicated region
        $region53: #{tpu_custom_call.1} parent=51 // pred_check
          %p608 = pneg %p129
        $region54: #{tpu_custom_call.1} parent=51 // pred_check_branch
          %610 = sbr.rel (%p608) target = $region56
        $region55: #{tpu_custom_call.1} parent=51 // pred_region
          %s611 = sand.u32 %s114, 1
          %s612 = scalar_lea.sflag [#allocation4], %s611
          %s613 = sand.u32 %s114, 1
          %s614 = smul.addr %s613, 256
          %s615 = scalar_lea.vmem [#allocation8], %s614
          %616 = dma.done %s612, 4096
        $region56: #{tpu_custom_call.1} parent=51 // pred_fallthru
          _
      $region52: #{tpu_custom_call.1} parent=5 // pred_fallthru
        _
    $region6: #{tpu_custom_call.1} parent=1 // loop_footer
      %s20 = sadd.s32 1, %s16
    $region7: #{tpu_custom_call.1} parent=1 // loop_footer_branch
      %15 = sbr.rel target = $region3
    $region8: #{tpu_custom_call.1} parent=1 // loop_exit
      _
    %617 = vsyncpa [#allocation3], 1
    %s618 = scalar_lea.sflag [#allocation3], 1
    %619 = vsyncpa %s618, 1
    %620 = vsyncpa [#allocation6], 1
    %621 = vsyncpa [#allocation4], 1
    %s622 = scalar_lea.sflag [#allocation4], 1
    %623 = vsyncpa %s622, 1

// kernel: tpu_custom_call.1
$region0: #{tpu_custom_call.1}
  #allocation0 [shape = 'u32[]', space=smem, size = 0x4, offset = 0x4, fixed_abs, tag = 'smem constant byte address 0x4 - core index']
  #allocation1 [shape = 'u32[144,128]{1,0:T(1,128)}', space=vmem, size = 0x12000, scoped, tag = 'internal scratch']
  %s0 = inlined_call_operand.hbm [shape: f32[2,256,128], index: 0, kind: input, shape index: {}]
  %s1 = inlined_call_operand.hbm [shape: f32[128,128], index: 1, kind: input, shape index: {}]
  %s2 = inlined_call_operand.hbm [shape: f32[1,128], index: 2, kind: input, shape index: {}]
  %s3 = inlined_call_operand.hbm [shape: f32[2,256,128], index: 3, kind: output, shape index: {}]
  %s4 = sld [smem:[#allocation0]]
  $region57: #{tpu_custom_call.1} parent=0
    _
  %s6 = ssub.s32 1, %s4
  %s7 = scalar_select 0, %s6, %s4
  $region1: #{tpu_custom_call.1} parent=0
    #allocation2 [shape = 'u8[262144]{0}', space=vmem, size = 0x40000, scoped, tag = 'input window, operand 0']
    #allocation3 [shape = 's32[2]{0}', space=sflag, size = 0x8, scoped, tag = 'scoped memory for tpu_custom_call.1']
    #allocation4 [shape = 's32[2]{0}', space=sflag, size = 0x8, scoped, tag = 'scoped memory for tpu_custom_call.1']
    #allocation5 [shape = 'u8[65536]{0}', space=vmem, size = 0x10000, scoped, tag = 'input window, operand 1, single buffered']
    #allocation6 [shape = 's32[1]{0}', space=sflag, size = 0x4, scoped, tag = 'scoped memory for tpu_custom_call.1']
    #allocation7 [shape = 'u8[512]{0}', space=vmem, size = 0x400, scoped, tag = 'input window, operand 2, single buffered']
    #allocation8 [shape = 'u8[262144]{0}', space=vmem, size = 0x40000, scoped, tag = 'output window, operand 0']
    %8 = vsyncpa [#allocation3], 0
    %s9 = scalar_lea.sflag [#allocation3], 1
    %10 = vsyncpa %s9, 0
    %11 = vsyncpa [#allocation6], 0
    %12 = vsyncpa [#allocation4], 0
    %s13 = scalar_lea.sflag [#allocation4], 1
    %14 = vsyncpa %s13, 0
    loop: start=0, step=1, limit=4
    $region2: #{tpu_custom_call.1} parent=1 // loop_pre_header
      _
    $region3: #{tpu_custom_call.1} parent=1 // loop_header
      %s16 = sphi 0, %s20
      %p17 = scmp.ge.s32.totalorder %s16, 4
      %s23 = sphi 0, %s35
      %s24 = sphi 0, %s31
      %s25 = sphi 0, %s23
      %s26 = sphi 0, %s24
      %s27 = sphi 0, %s25
      %s28 = sphi 0, %s26
      %s40 = sphi 0, %s42
      %s43 = sphi 0, %s40
      %s44 = sphi 0, %s43
      %s60 = sphi 0, %s44
      %s64 = sphi 0, %s64
      %s66 = sphi 0, %s64
      %s67 = sphi 0, %s66
      %s81 = sphi 0, %s67
      %s85 = sphi 0, %s85
      %s87 = sphi 0, %s85
      %s88 = sphi 0, %s87
      %s102 = sphi 0, %s88
      %s110 = sphi 0, %s112
      %s113 = sphi 0, %s110
      %s114 = sphi 0, %s113
      %s130 = sphi 0, %s114
    $region4: #{tpu_custom_call.1} parent=1 // loop_header_branch
      %19 = sbr.rel (%p17) target = $region8
    $region5: #{tpu_custom_call.1} parent=1 // loop_body
      %s21 = ssub.s32 %s16, 1
      %s22 = ssub.s32 %s16, 2
      %s29 = sadd.s32 1, %s24
      %p30 = scmp.ge.s32.totalorder %s29, 1
      %s31 = scalar_select %p30, 0, %s29
      %s32 = sadd.s32 1, %s23
      %s33 = scalar_select %p30, %s32, %s23
      %p34 = scmp.ge.s32.totalorder %s33, 2
      %s35 = scalar_select %p34, 0, %s33
      %s36 = ssub.s32 %s23, %s35
      %s37 = ssub.s32 %s24, %s31
      %s38 = sor.u32 %s36, %s37
      %p39 = scmp.eq.s32.totalorder %s38, 0
      %s41 = sadd.s32 %s40, 1
      %s42 = scalar_select %p39, %s40, %s41
      %p45 = pneg %p39
      %p46 = scmp.eq.s32.totalorder %s16, 1
      %p47 = por %p45, %p46
      %p48 = scmp.ne.s32.totalorder %s40, %s43
      %p49 = scmp.eq.s32.totalorder %s16, 0
      %p50 = por %p48, %p49
      %p51 = scmp.ne.s32.totalorder %s40, %s43
      %p52 = scmp.eq.s32.totalorder %s21, 1
      %p53 = por %p51, %p52
      %p54 = scmp.ne.s32.totalorder %s43, %s44
      %p55 = scmp.eq.s32.totalorder %s21, 0
      %p56 = por %p54, %p55
      %p57 = scmp.ne.s32.totalorder %s43, %s44
      %p58 = scmp.eq.s32.totalorder %s22, 1
      %p59 = por %p57, %p58
      %p61 = scmp.ne.s32.totalorder %s44, %s60
      %p62 = scmp.eq.s32.totalorder %s22, 0
      %p63 = por %p61, %p62
      %s65 = sadd.s32 %s64, 1
      %p68 = scmp.eq.s32.totalorder %s16, 1
      %p69 = scmp.ne.s32.totalorder %s64, %s66
      %p70 = scmp.eq.s32.totalorder %s16, 0
      %p71 = por %p69, %p70
      %p72 = scmp.ne.s32.totalorder %s64, %s66
      %p73 = scmp.eq.s32.totalorder %s21, 1
      %p74 = por %p72, %p73
      %p75 = scmp.ne.s32.totalorder %s66, %s67
      %p76 = scmp.eq.s32.totalorder %s21, 0
      %p77 = por %p75, %p76
      %p78 = scmp.ne.s32.totalorder %s66, %s67
      %p79 = scmp.eq.s32.totalorder %s22, 1
      %p80 = por %p78, %p79
      %p82 = scmp.ne.s32.totalorder %s67, %s81
      %p83 = scmp.eq.s32.totalorder %s22, 0
      %p84 = por %p82, %p83
      %s86 = sadd.s32 %s85, 1
      %p89 = scmp.eq.s32.totalorder %s16, 1
      %p90 = scmp.ne.s32.totalorder %s85, %s87
      %p91 = scmp.eq.s32.totalorder %s16, 0
      %p92 = por %p90, %p91
      %p93 = scmp.ne.s32.totalorder %s85, %s87
      %p94 = scmp.eq.s32.totalorder %s21, 1
      %p95 = por %p93, %p94
      %p96 = scmp.ne.s32.totalorder %s87, %s88
      %p97 = scmp.eq.s32.totalorder %s21, 0
      %p98 = por %p96, %p97
      %p99 = scmp.ne.s32.totalorder %s87, %s88
      %p100 = scmp.eq.s32.totalorder %s22, 1
      %p101 = por %p99, %p100
      %p103 = scmp.ne.s32.totalorder %s88, %s102
      %p104 = scmp.eq.s32.totalorder %s22, 0
      %p105 = por %p103, %p104
      %s106 = ssub.s32 %s23, %s35
      %s107 = ssub.s32 %s24, %s31
      %s108 = sor.u32 %s106, %s107
      %p109 = scmp.eq.s32.totalorder %s108, 0
      %s111 = sadd.s32 %s110, 1
      %s112 = scalar_select %p109, %s110, %s111
      %p115 = pneg %p109
      %p116 = scmp.eq.s32.totalorder %s16, 1
      %p117 = por %p115, %p116
      %p118 = scmp.ne.s32.totalorder %s110, %s113
      %p119 = scmp.eq.s32.totalorder %s16, 0
      %p120 = por %p118, %p119
      %p121 = scmp.ne.s32.totalorder %s110, %s113
      %p122 = scmp.eq.s32.totalorder %s21, 1
      %p123 = por %p121, %p122
      %p124 = scmp.ne.s32.totalorder %s113, %s114
      %p125 = scmp.eq.s32.totalorder %s21, 0
      %p126 = por %p124, %p125
      %p127 = scmp.ne.s32.totalorder %s113, %s114
      %p128 = scmp.eq.s32.totalorder %s22, 1
      %p129 = por %p127, %p128
      %p131 = scmp.ne.s32.totalorder %s114, %s130
      %p132 = scmp.eq.s32.totalorder %s22, 0
      %p133 = por %p131, %p132
      %p134 = scmp.le.s32.totalorder 1, %s16
      %p135 = scmp.lt.s32.totalorder %s16, 3
      %p136 = pnand %p134, %p135
      %p137 = pneg %p136
      // Predicated region
      $region9: #{tpu_custom_call.1} parent=5 // pred_check
        _
      $region10: #{tpu_custom_call.1} parent=5 // pred_check_branch
        %139 = sbr.rel (%p136) target = $region12
      $region11: #{tpu_custom_call.1} parent=5 // pred_region
        %s140 = ssub.s32 %s16, 1
        // Predicated region
        $region13: #{tpu_custom_call.1} parent=11 // pred_check
          %p141 = pneg %p77
        $region14: #{tpu_custom_call.1} parent=11 // pred_check_branch
          %143 = sbr.rel (%p141) target = $region16
        $region15: #{tpu_custom_call.1} parent=11 // pred_region
          %s145 = ssub.s32 2048, 2048
          %146 = vsyncadd [#allocation6], %s145
          %s147 = sshll.u32 [#allocation5], 4
          %s148 = int_to_ptr.vmem [resolvable:$true] %s147
          %153 = dma.hbm_to_vmem [thread:$0]  %s1, 2048, %s148, [#allocation6], 128, 128, 8
        $region16: #{tpu_custom_call.1} parent=11 // pred_fallthru
          _
        // Predicated region
        $region17: #{tpu_custom_call.1} parent=11 // pred_check
          %p154 = pneg %p98
        $region18: #{tpu_custom_call.1} parent=11 // pred_check_branch
          %156 = sbr.rel (%p154) target = $region20
        $region19: #{tpu_custom_call.1} parent=11 // pred_region
          %s158 = ssub.s32 16, 16
          %159 = vsyncadd [#allocation6], %s158
          %s161 = sshll.u32 [#allocation7], 4
          %s162 = int_to_ptr.vmem [resolvable:$true] %s161
          %164 = dma.hbm_to_vmem [thread:$0]  %s2, 16, %s162, [#allocation6]
        $region20: #{tpu_custom_call.1} parent=11 // pred_fallthru
          _
      $region12: #{tpu_custom_call.1} parent=5 // pred_fallthru
        _
      %p165 = scmp.lt.s32.totalorder %s16, 2
      // Predicated region
      $region21: #{tpu_custom_call.1} parent=5 // pred_check
        %p166 = pneg %p165
      $region22: #{tpu_custom_call.1} parent=5 // pred_check_branch
        %168 = sbr.rel (%p166) target = $region24
      $region23: #{tpu_custom_call.1} parent=5 // pred_region
        // Predicated region
        $region25: #{tpu_custom_call.1} parent=23 // pred_check
          %p169 = pneg %p50
        $region26: #{tpu_custom_call.1} parent=23 // pred_check_branch
          %171 = sbr.rel (%p169) target = $region28
        $region27: #{tpu_custom_call.1} parent=23 // pred_region
          %s172 = sand.u32 %s40, 1
          %s173 = scalar_lea.sflag [#allocation3], %s172
          %s174 = sand.u32 %s40, 1
          %s175 = smul.addr %s174, 256
          %s176 = scalar_lea.vmem [#allocation2], %s175
          %s177 = smul.u32 32, %s24
          %s179 = ssub.s32 4096, 4096
          %180 = vsyncadd %s173, %s179
          %s181 = smul.addr %s23, 32
          %s182 = sadd.s32 %s177, %s181
          %s183 = smul.addr %s182, 128
          %s184 = scalar_lea.hbm %s0, %s183
          %s185 = sshll.u32 %s176, 4
          %s186 = int_to_ptr.vmem [resolvable:$true] %s185
          %191 = dma.hbm_to_vmem [thread:$0]  %s184, 4096, %s186, %s173, 128, 128, 8
        $region28: #{tpu_custom_call.1} parent=23 // pred_fallthru
          _
      $region24: #{tpu_custom_call.1} parent=5 // pred_fallthru
        _
      %p192 = scmp.le.s32.totalorder 1, %s16
      %p193 = scmp.lt.s32.totalorder %s16, 3
      %p194 = pnand %p192, %p193
      %p195 = pneg %p194
      // Predicated region
      $region29: #{tpu_custom_call.1} parent=5 // pred_check
        _
      $region30: #{tpu_custom_call.1} parent=5 // pred_check_branch
        %197 = sbr.rel (%p194) target = $region32
      $region31: #{tpu_custom_call.1} parent=5 // pred_region
        %s198 = ssub.s32 %s16, 1
        %s199 = sand.u32 %s43, 1
        %s200 = scalar_lea.sflag [#allocation3], %s199
        %s201 = sand.u32 %s43, 1
        %s202 = smul.addr %s201, 256
        %s203 = scalar_lea.vmem [#allocation2], %s202
        // Predicated region
        $region33: #{tpu_custom_call.1} parent=31 // pred_check
          %p204 = pneg %p56
        $region34: #{tpu_custom_call.1} parent=31 // pred_check_branch
          %206 = sbr.rel (%p204) target = $region36
        $region35: #{tpu_custom_call.1} parent=31 // pred_region
          %207 = dma.done %s200, 4096
        $region36: #{tpu_custom_call.1} parent=31 // pred_fallthru
          _
        // Predicated region
        $region37: #{tpu_custom_call.1} parent=31 // pred_check
          %p208 = pneg %p77
        $region38: #{tpu_custom_call.1} parent=31 // pred_check_branch
          %210 = sbr.rel (%p208) target = $region40
        $region39: #{tpu_custom_call.1} parent=31 // pred_region
          %211 = dma.done [#allocation6], 2048
        $region40: #{tpu_custom_call.1} parent=31 // pred_fallthru
          _
        // Predicated region
        $region41: #{tpu_custom_call.1} parent=31 // pred_check
          %p212 = pneg %p98
        $region42: #{tpu_custom_call.1} parent=31 // pred_check_branch
          %214 = sbr.rel (%p212) target = $region44
        $region43: #{tpu_custom_call.1} parent=31 // pred_region
          %215 = dma.done [#allocation6], 16
        $region44: #{tpu_custom_call.1} parent=31 // pred_fallthru
          _
        %s216 = sand.u32 %s43, 1
        %s217 = scalar_lea.sflag [#allocation3], %s216
        %s218 = sand.u32 %s43, 1
        %s219 = smul.addr %s218, 256
        %s220 = scalar_lea.vmem [#allocation2], %s219
        %p221 = pneg %p56
        %p222 = pneg %p53
        %p223 = pneg %p77
        %p224 = pneg %p74
        %p225 = pneg %p98
        %p226 = pneg %p95
        %p227 = pneg %p126
        %p228 = pneg %p123
        %s229 = sand.u32 %s113, 1
        %s230 = scalar_lea.sflag [#allocation4], %s229
        %s231 = sand.u32 %s113, 1
        %s232 = smul.addr %s231, 256
        %s233 = scalar_lea.vmem [#allocation8], %s232
        %s234 = smul.u32 32, %s26
        %s235 = smul.u32 32, %s26
        %v236 = vld [vmem:[%s203] sm:$0xff]
        %v237 = vld [vmem:[%s203 + $0x8] sm:$0xff]
        %v238 = vld [vmem:[%s203 + $0x10] sm:$0xff]
        %v239 = vld [vmem:[%s203 + $0x18] sm:$0xff]
        %v240 = vld [vmem:[%s203 + $0x20] sm:$0xff]
        %v241 = vld [vmem:[%s203 + $0x28] sm:$0xff]
        %v242 = vld [vmem:[%s203 + $0x30] sm:$0xff]
        %v243 = vld [vmem:[%s203 + $0x38] sm:$0xff]
        %v244 = vld [vmem:[%s203 + $0x40] sm:$0xff]
        %v245 = vld [vmem:[%s203 + $0x48] sm:$0xff]
        %v246 = vld [vmem:[%s203 + $0x50] sm:$0xff]
        %v247 = vld [vmem:[%s203 + $0x58] sm:$0xff]
        %v248 = vld [vmem:[%s203 + $0x60] sm:$0xff]
        %v249 = vld [vmem:[%s203 + $0x68] sm:$0xff]
        %v250 = vld [vmem:[%s203 + $0x70] sm:$0xff]
        %v251 = vld [vmem:[%s203 + $0x78] sm:$0xff]
        %v252 = vld [vmem:[%s203 + $0x80] sm:$0xff]
        %v253 = vld [vmem:[%s203 + $0x88] sm:$0xff]
        %v254 = vld [vmem:[%s203 + $0x90] sm:$0xff]
        %v255 = vld [vmem:[%s203 + $0x98] sm:$0xff]
        %v256 = vld [vmem:[%s203 + $0xa0] sm:$0xff]
        %v257 = vld [vmem:[%s203 + $0xa8] sm:$0xff]
        %v258 = vld [vmem:[%s203 + $0xb0] sm:$0xff]
        %v259 = vld [vmem:[%s203 + $0xb8] sm:$0xff]
        %v260 = vld [vmem:[%s203 + $0xc0] sm:$0xff]
        %v261 = vld [vmem:[%s203 + $0xc8] sm:$0xff]
        %v262 = vld [vmem:[%s203 + $0xd0] sm:$0xff]
        %v263 = vld [vmem:[%s203 + $0xd8] sm:$0xff]
        %v264 = vld [vmem:[%s203 + $0xe0] sm:$0xff]
        %v265 = vld [vmem:[%s203 + $0xe8] sm:$0xff]
        %v266 = vld [vmem:[%s203 + $0xf0] sm:$0xff]
        %v267 = vld [vmem:[%s203 + $0xf8] sm:$0xff]
        %v268 = vld [vmem:[#allocation5] sm:$0xff]
        %v269 = vld [vmem:[#allocation5 + $0x8] sm:$0xff]
        %v270 = vld [vmem:[#allocation5 + $0x10] sm:$0xff]
        %v271 = vld [vmem:[#allocation5 + $0x18] sm:$0xff]
        %v272 = vld [vmem:[#allocation5 + $0x20] sm:$0xff]
        %v273 = vld [vmem:[#allocation5 + $0x28] sm:$0xff]
        %v274 = vld [vmem:[#allocation5 + $0x30] sm:$0xff]
        %v275 = vld [vmem:[#allocation5 + $0x38] sm:$0xff]
        %v276 = vld [vmem:[#allocation5 + $0x40] sm:$0xff]
        %v277 = vld [vmem:[#allocation5 + $0x48] sm:$0xff]
        %v278 = vld [vmem:[#allocation5 + $0x50] sm:$0xff]
        %v279 = vld [vmem:[#allocation5 + $0x58] sm:$0xff]
        %v280 = vld [vmem:[#allocation5 + $0x60] sm:$0xff]
        %v281 = vld [vmem:[#allocation5 + $0x68] sm:$0xff]
        %v282 = vld [vmem:[#allocation5 + $0x70] sm:$0xff]
        %v283 = vld [vmem:[#allocation5 + $0x78] sm:$0xff]
        %v284 = vld [vmem:[#allocation7] sm:$0x1]
        %v286 = vlaneseq
        %v287 = vshrl.u32 %v286, 7
        %v288 = vsub.s32 0, %v287
        %v289 = vrot.slane %v284, %v288
        %291 = vmatprep.subr.mxu0 0.0
        %292 = vmatpush1.msra.mxu0 %v268
        %293 = vmatprep.subr.mxu0 0.0
        %294 = vmatpush1.msra.mxu0 %v269
        %295 = vmatprep.subr.mxu0 0.0
        %296 = vmatpush1.msra.mxu0 %v270
        %297 = vmatprep.subr.mxu0 0.0
        %298 = vmatpush1.msra.mxu0 %v271
        %299 = vmatprep.subr.mxu0 0.0
        %300 = vmatpush1.msra.mxu0 %v272
        %301 = vmatprep.subr.mxu0 0.0
        %302 = vmatpush1.msra.mxu0 %v273
        %303 = vmatprep.subr.mxu0 0.0
        %304 = vmatpush1.msra.mxu0 %v274
        %305 = vmatprep.subr.mxu0 0.0
        %306 = vmatpush1.msra.mxu0 %v275
        %307 = vmatprep.subr.mxu0 0.0
        %308 = vmatpush1.msra.mxu0 %v276
        %309 = vmatprep.subr.mxu0 0.0
        %310 = vmatpush1.msra.mxu0 %v277
        %311 = vmatprep.subr.mxu0 0.0
        %312 = vmatpush1.msra.mxu0 %v278
        %313 = vmatprep.subr.mxu0 0.0
        %314 = vmatpush1.msra.mxu0 %v279
        %315 = vmatprep.subr.mxu0 0.0
        %316 = vmatpush1.msra.mxu0 %v280
        %317 = vmatprep.subr.mxu0 0.0
        %318 = vmatpush1.msra.mxu0 %v281
        %319 = vmatprep.subr.mxu0 0.0
        %320 = vmatpush1.msra.mxu0 %v282
        %321 = vmatprep.subr.mxu0 0.0
        %322 = vmatpush1.msra.mxu0 %v283
        %323 = vmatprep.subr.mxu0 0.0
        %324 = vmatpush1.msra.mxu0 0.0
        %325 = vmatprep.subr.mxu0 0.0
        %326 = vmatpush1.msra.mxu0 0.0
        %327 = vmatprep.subr.mxu0 0.0
        %328 = vmatpush1.msra.mxu0 0.0
        %329 = vmatprep.subr.mxu0 0.0
        %330 = vmatpush1.msra.mxu0 0.0
        %331 = vmatprep.subr.mxu0 0.0
        %332 = vmatpush1.msra.mxu0 0.0
        %333 = vmatprep.subr.mxu0 0.0
        %334 = vmatpush1.msra.mxu0 0.0
        %335 = vmatprep.subr.mxu0 0.0
        %336 = vmatpush1.msra.mxu0 0.0
        %337 = vmatprep.subr.mxu0 0.0
        %338 = vmatpush1.msra.mxu0 0.0
        %339 = vmatprep.subr.mxu0 0.0
        %340 = vmatpush1.msra.mxu0 0.0
        %341 = vmatprep.subr.mxu0 0.0
        %342 = vmatpush1.msra.mxu0 0.0
        %343 = vmatprep.subr.mxu0 0.0
        %344 = vmatpush1.msra.mxu0 0.0
        %345 = vmatprep.subr.mxu0 0.0
        %346 = vmatpush1.msra.mxu0 0.0
        %347 = vmatprep.subr.mxu0 0.0
        %348 = vmatpush1.msra.mxu0 0.0
        %349 = vmatprep.subr.mxu0 0.0
        %350 = vmatpush1.msra.mxu0 0.0
        %351 = vmatprep.subr.mxu0 0.0
        %352 = vmatpush1.msra.mxu0 0.0
        %353 = vmatprep.subr.mxu0 0.0
        %354 = vmatpush1.msra.mxu0 0.0
        %355 = vmatprep.mubr.f32.mxu0 0.0
        %356 = vmatmul.mubr.f32.gmra.mrb[0].mxu0 %v236
        %v357 = vpop.f32.mrb[0].mxu0
        %v358 = vadd.f32 %v289, %v357
        %v359 = vpop.f32.mrb[0].mxu0
        %360 = vmatprep.mubr.f32.mxu0 0.0
        %361 = vmatmul.mubr.f32.gmra.mrb[0].mxu0 %v237
        %v362 = vpop.f32.mrb[0].mxu0
        %v363 = vadd.f32 %v289, %v362
        %v364 = vpop.f32.mrb[0].mxu0
        %365 = vmatprep.mubr.f32.mxu0 0.0
        %366 = vmatmul.mubr.f32.gmra.mrb[0].mxu0 %v238
        %v367 = vpop.f32.mrb[0].mxu0
        %v368 = vadd.f32 %v289, %v367
        %v369 = vpop.f32.mrb[0].mxu0
        %370 = vmatprep.mubr.f32.mxu0 0.0
        %371 = vmatmul.mubr.f32.gmra.mrb[0].mxu0 %v239
        %v372 = vpop.f32.mrb[0].mxu0
        %v373 = vadd.f32 %v289, %v372
        %v374 = vpop.f32.mrb[0].mxu0
        %375 = vmatprep.mubr.f32.mxu0 0.0
        %376 = vmatmul.mubr.f32.gmra.mrb[0].mxu0 %v240
        %v377 = vpop.f32.mrb[0].mxu0
        %v378 = vadd.f32 %v289, %v377
        %v379 = vpop.f32.mrb[0].mxu0
        %380 = vmatprep.mubr.f32.mxu0 0.0
        %381 = vmatmul.mubr.f32.gmra.mrb[0].mxu0 %v241
        %v382 = vpop.f32.mrb[0].mxu0
        %v383 = vadd.f32 %v289, %v382
        %v384 = vpop.f32.mrb[0].mxu0
        %385 = vmatprep.mubr.f32.mxu0 0.0
        %386 = vmatmul.mubr.f32.gmra.mrb[0].mxu0 %v242
        %v387 = vpop.f32.mrb[0].mxu0
        %v388 = vadd.f32 %v289, %v387
        %v389 = vpop.f32.mrb[0].mxu0
        %390 = vmatprep.mubr.f32.mxu0 0.0
        %391 = vmatmul.mubr.f32.gmra.mrb[0].mxu0 %v243
        %v392 = vpop.f32.mrb[0].mxu0
        %v393 = vadd.f32 %v289, %v392
        %v394 = vpop.f32.mrb[0].mxu0
        %395 = vmatprep.mubr.f32.mxu0 0.0
        %396 = vmatmul.mubr.f32.gmra.mrb[0].mxu0 %v244
        %v397 = vpop.f32.mrb[0].mxu0
        %v398 = vadd.f32 %v289, %v397
        %v399 = vpop.f32.mrb[0].mxu0
        %400 = vmatprep.mubr.f32.mxu0 0.0
        %401 = vmatmul.mubr.f32.gmra.mrb[0].mxu0 %v245
        %v402 = vpop.f32.mrb[0].mxu0
        %v403 = vadd.f32 %v289, %v402
        %v404 = vpop.f32.mrb[0].mxu0
        %405 = vmatprep.mubr.f32.mxu0 0.0
        %406 = vmatmul.mubr.f32.gmra.mrb[0].mxu0 %v246
        %v407 = vpop.f32.mrb[0].mxu0
        %v408 = vadd.f32 %v289, %v407
        %v409 = vpop.f32.mrb[0].mxu0
        %410 = vmatprep.mubr.f32.mxu0 0.0
        %411 = vmatmul.mubr.f32.gmra.mrb[0].mxu0 %v247
        %v412 = vpop.f32.mrb[0].mxu0
        %v413 = vadd.f32 %v289, %v412
        %v414 = vpop.f32.mrb[0].mxu0
        %415 = vmatprep.mubr.f32.mxu0 0.0
        %416 = vmatmul.mubr.f32.gmra.mrb[0].mxu0 %v248
        %v417 = vpop.f32.mrb[0].mxu0
        %v418 = vadd.f32 %v289, %v417
        %v419 = vpop.f32.mrb[0].mxu0
        %420 = vmatprep.mubr.f32.mxu0 0.0
        %421 = vmatmul.mubr.f32.gmra.mrb[0].mxu0 %v249
        %v422 = vpop.f32.mrb[0].mxu0
        %v423 = vadd.f32 %v289, %v422
        %v424 = vpop.f32.mrb[0].mxu0
        %425 = vmatprep.mubr.f32.mxu0 0.0
        %426 = vmatmul.mubr.f32.gmra.mrb[0].mxu0 %v250
        %v427 = vpop.f32.mrb[0].mxu0
        %v428 = vadd.f32 %v289, %v427
        %v429 = vpop.f32.mrb[0].mxu0
        %430 = vmatprep.mubr.f32.mxu0 0.0
        %431 = vmatmul.mubr.f32.gmra.mrb[0].mxu0 %v251
        %v432 = vpop.f32.mrb[0].mxu0
        %v433 = vadd.f32 %v289, %v432
        %v434 = vpop.f32.mrb[0].mxu0
        %435 = vmatprep.mubr.f32.mxu0 0.0
        %436 = vmatmul.mubr.f32.gmra.mrb[0].mxu0 %v252
        %v437 = vpop.f32.mrb[0].mxu0
        %v438 = vadd.f32 %v289, %v437
        %v439 = vpop.f32.mrb[0].mxu0
        %440 = vmatprep.mubr.f32.mxu0 0.0
        %441 = vmatmul.mubr.f32.gmra.mrb[0].mxu0 %v253
        %v442 = vpop.f32.mrb[0].mxu0
        %v443 = vadd.f32 %v289, %v442
        %v444 = vpop.f32.mrb[0].mxu0
        %445 = vmatprep.mubr.f32.mxu0 0.0
        %446 = vmatmul.mubr.f32.gmra.mrb[0].mxu0 %v254
        %v447 = vpop.f32.mrb[0].mxu0
        %v448 = vadd.f32 %v289, %v447
        %v449 = vpop.f32.mrb[0].mxu0
        %450 = vmatprep.mubr.f32.mxu0 0.0
        %451 = vmatmul.mubr.f32.gmra.mrb[0].mxu0 %v255
        %v452 = vpop.f32.mrb[0].mxu0
        %v453 = vadd.f32 %v289, %v452
        %v454 = vpop.f32.mrb[0].mxu0
        %455 = vmatprep.mubr.f32.mxu0 0.0
        %456 = vmatmul.mubr.f32.gmra.mrb[0].mxu0 %v256
        %v457 = vpop.f32.mrb[0].mxu0
        %v458 = vadd.f32 %v289, %v457
        %v459 = vpop.f32.mrb[0].mxu0
        %460 = vmatprep.mubr.f32.mxu0 0.0
        %461 = vmatmul.mubr.f32.gmra.mrb[0].mxu0 %v257
        %v462 = vpop.f32.mrb[0].mxu0
        %v463 = vadd.f32 %v289, %v462
        %v464 = vpop.f32.mrb[0].mxu0
        %465 = vmatprep.mubr.f32.mxu0 0.0
        %466 = vmatmul.mubr.f32.gmra.mrb[0].mxu0 %v258
        %v467 = vpop.f32.mrb[0].mxu0
        %v468 = vadd.f32 %v289, %v467
        %v469 = vpop.f32.mrb[0].mxu0
        %470 = vmatprep.mubr.f32.mxu0 0.0
        %471 = vmatmul.mubr.f32.gmra.mrb[0].mxu0 %v259
        %v472 = vpop.f32.mrb[0].mxu0
        %v473 = vadd.f32 %v289, %v472
        %v474 = vpop.f32.mrb[0].mxu0
        %475 = vmatprep.mubr.f32.mxu0 0.0
        %476 = vmatmul.mubr.f32.gmra.mrb[0].mxu0 %v260
        %v477 = vpop.f32.mrb[0].mxu0
        %v478 = vadd.f32 %v289, %v477
        %v479 = vpop.f32.mrb[0].mxu0
        %480 = vmatprep.mubr.f32.mxu0 0.0
        %481 = vmatmul.mubr.f32.gmra.mrb[0].mxu0 %v261
        %v482 = vpop.f32.mrb[0].mxu0
        %v483 = vadd.f32 %v289, %v482
        %v484 = vpop.f32.mrb[0].mxu0
        %485 = vmatprep.mubr.f32.mxu0 0.0
        %486 = vmatmul.mubr.f32.gmra.mrb[0].mxu0 %v262
        %v487 = vpop.f32.mrb[0].mxu0
        %v488 = vadd.f32 %v289, %v487
        %v489 = vpop.f32.mrb[0].mxu0
        %490 = vmatprep.mubr.f32.mxu0 0.0
        %491 = vmatmul.mubr.f32.gmra.mrb[0].mxu0 %v263
        %v492 = vpop.f32.mrb[0].mxu0
        %v493 = vadd.f32 %v289, %v492
        %v494 = vpop.f32.mrb[0].mxu0
        %495 = vmatprep.mubr.f32.mxu0 0.0
        %496 = vmatmul.mubr.f32.gmra.mrb[0].mxu0 %v264
        %v497 = vpop.f32.mrb[0].mxu0
        %v498 = vadd.f32 %v289, %v497
        %v499 = vpop.f32.mrb[0].mxu0
        %500 = vmatprep.mubr.f32.mxu0 0.0
        %501 = vmatmul.mubr.f32.gmra.mrb[0].mxu0 %v265
        %v502 = vpop.f32.mrb[0].mxu0
        %v503 = vadd.f32 %v289, %v502
        %v504 = vpop.f32.mrb[0].mxu0
        %505 = vmatprep.mubr.f32.mxu0 0.0
        %506 = vmatmul.mubr.f32.gmra.mrb[0].mxu0 %v266
        %v507 = vpop.f32.mrb[0].mxu0
        %v508 = vadd.f32 %v289, %v507
        %v509 = vpop.f32.mrb[0].mxu0
        %510 = vmatprep.mubr.f32.mxu0 0.0
        %511 = vmatmul.mubr.f32.gmra.mrb[0].mxu0 %v267
        %v512 = vpop.f32.mrb[0].mxu0
        %v513 = vadd.f32 %v289, %v512
        %v514 = vpop.f32.mrb[0].mxu0
        %515 = vdwg.mxu0
        %v516 = vmax.f32 %v358, 0.0
        %v517 = vmax.f32 %v363, 0.0
        %v518 = vmax.f32 %v368, 0.0
        %v519 = vmax.f32 %v373, 0.0
        %v520 = vmax.f32 %v378, 0.0
        %v521 = vmax.f32 %v383, 0.0
        %v522 = vmax.f32 %v388, 0.0
        %v523 = vmax.f32 %v393, 0.0
        %v524 = vmax.f32 %v398, 0.0
        %v525 = vmax.f32 %v403, 0.0
        %v526 = vmax.f32 %v408, 0.0
        %v527 = vmax.f32 %v413, 0.0
        %v528 = vmax.f32 %v418, 0.0
        %v529 = vmax.f32 %v423, 0.0
        %v530 = vmax.f32 %v428, 0.0
        %v531 = vmax.f32 %v433, 0.0
        %v532 = vmax.f32 %v438, 0.0
        %v533 = vmax.f32 %v443, 0.0
        %v534 = vmax.f32 %v448, 0.0
        %v535 = vmax.f32 %v453, 0.0
        %v536 = vmax.f32 %v458, 0.0
        %v537 = vmax.f32 %v463, 0.0
        %v538 = vmax.f32 %v468, 0.0
        %v539 = vmax.f32 %v473, 0.0
        %v540 = vmax.f32 %v478, 0.0
        %v541 = vmax.f32 %v483, 0.0
        %v542 = vmax.f32 %v488, 0.0
        %v543 = vmax.f32 %v493, 0.0
        %v544 = vmax.f32 %v498, 0.0
        %v545 = vmax.f32 %v503, 0.0
        %v546 = vmax.f32 %v508, 0.0
        %v547 = vmax.f32 %v513, 0.0
        %548 = vst [vmem:[%s233] sm:$0xff] %v516
        %549 = vst [vmem:[%s233 + $0x8] sm:$0xff] %v517
        %550 = vst [vmem:[%s233 + $0x10] sm:$0xff] %v518
        %551 = vst [vmem:[%s233 + $0x18] sm:$0xff] %v519
        %552 = vst [vmem:[%s233 + $0x20] sm:$0xff] %v520
        %553 = vst [vmem:[%s233 + $0x28] sm:$0xff] %v521
        %554 = vst [vmem:[%s233 + $0x30] sm:$0xff] %v522
        %555 = vst [vmem:[%s233 + $0x38] sm:$0xff] %v523
        %556 = vst [vmem:[%s233 + $0x40] sm:$0xff] %v524
        %557 = vst [vmem:[%s233 + $0x48] sm:$0xff] %v525
        %558 = vst [vmem:[%s233 + $0x50] sm:$0xff] %v526
        %559 = vst [vmem:[%s233 + $0x58] sm:$0xff] %v527
        %560 = vst [vmem:[%s233 + $0x60] sm:$0xff] %v528
        %561 = vst [vmem:[%s233 + $0x68] sm:$0xff] %v529
        %562 = vst [vmem:[%s233 + $0x70] sm:$0xff] %v530
        %563 = vst [vmem:[%s233 + $0x78] sm:$0xff] %v531
        %564 = vst [vmem:[%s233 + $0x80] sm:$0xff] %v532
        %565 = vst [vmem:[%s233 + $0x88] sm:$0xff] %v533
        %566 = vst [vmem:[%s233 + $0x90] sm:$0xff] %v534
        %567 = vst [vmem:[%s233 + $0x98] sm:$0xff] %v535
        %568 = vst [vmem:[%s233 + $0xa0] sm:$0xff] %v536
        %569 = vst [vmem:[%s233 + $0xa8] sm:$0xff] %v537
        %570 = vst [vmem:[%s233 + $0xb0] sm:$0xff] %v538
        %571 = vst [vmem:[%s233 + $0xb8] sm:$0xff] %v539
        %572 = vst [vmem:[%s233 + $0xc0] sm:$0xff] %v540
        %573 = vst [vmem:[%s233 + $0xc8] sm:$0xff] %v541
        %574 = vst [vmem:[%s233 + $0xd0] sm:$0xff] %v542
        %575 = vst [vmem:[%s233 + $0xd8] sm:$0xff] %v543
        %576 = vst [vmem:[%s233 + $0xe0] sm:$0xff] %v544
        %577 = vst [vmem:[%s233 + $0xe8] sm:$0xff] %v545
        %578 = vst [vmem:[%s233 + $0xf0] sm:$0xff] %v546
        %579 = vst [vmem:[%s233 + $0xf8] sm:$0xff] %v547
        %s580 = sand.u32 %s113, 1
        %s581 = scalar_lea.sflag [#allocation4], %s580
        %s582 = sand.u32 %s113, 1
        %s583 = smul.addr %s582, 256
        %s584 = scalar_lea.vmem [#allocation8], %s583
        // Predicated region
        $region45: #{tpu_custom_call.1} parent=31 // pred_check
          %p585 = pneg %p123
        $region46: #{tpu_custom_call.1} parent=31 // pred_check_branch
          %587 = sbr.rel (%p585) target = $region48
        $region47: #{tpu_custom_call.1} parent=31 // pred_region
          %s588 = smul.u32 32, %s26
          %s590 = ssub.s32 4096, 4096
          %591 = vsyncadd %s581, %s590
          %s592 = smul.addr %s25, 32
          %s593 = sadd.s32 %s588, %s592
          %s594 = smul.addr %s593, 128
          %s595 = scalar_lea.hbm %s3, %s594
          %s596 = sshll.u32 %s584, 4
          %s597 = int_to_ptr.vmem [resolvable:$true] %s596
          %602 = dma.vmem_to_hbm [thread:$0]  %s597, 4096, %s595, %s581, 128, 128, 8
        $region48: #{tpu_custom_call.1} parent=31 // pred_fallthru
          _
      $region32: #{tpu_custom_call.1} parent=5 // pred_fallthru
        _
      %p603 = scmp.le.s32.totalorder 2, %s16
      // Predicated region
      $region49: #{tpu_custom_call.1} parent=5 // pred_check
        %p604 = pneg %p603
      $region50: #{tpu_custom_call.1} parent=5 // pred_check_branch
        %606 = sbr.rel (%p604) target = $region52
      $region51: #{tpu_custom_call.1} parent=5 // pred_region
        %s607 = ssub.s32 %s16, 2
        // Predicated region
        $region53: #{tpu_custom_call.1} parent=51 // pred_check
          %p608 = pneg %p129
        $region54: #{tpu_custom_call.1} parent=51 // pred_check_branch
          %610 = sbr.rel (%p608) target = $region56
        $region55: #{tpu_custom_call.1} parent=51 // pred_region
          %s611 = sand.u32 %s114, 1
          %s612 = scalar_lea.sflag [#allocation4], %s611
          %s613 = sand.u32 %s114, 1
          %s614 = smul.addr %s613, 256
          %s615 = scalar_lea.vmem [#allocation8], %s614
          %616 = dma.done %s612, 4096
        $region56: #{tpu_custom_call.1} parent=51 // pred_fallthru
          _
      $region52: #{tpu_custom_call.1} parent=5 // pred_fallthru
        _
    $region6: #{tpu_custom_call.1} parent=1 // loop_footer
      %s20 = sadd.s32 1, %s16
    $region7: #{tpu_custom_call.1} parent=1 // loop_footer_branch
      %15 = sbr.rel target = $region3
    $region8: #{tpu_custom_call.1} parent=1 // loop_exit
      _
    %617 = vsyncpa [#allocation3], 1
    %s618 = scalar_lea.sflag [#allocation3], 1
    %619 = vsyncpa %s618, 1
    %620 = vsyncpa [#allocation6], 1
    %621 = vsyncpa [#allocation4], 1
    %s622 = scalar_lea.sflag [#allocation4], 1
    %623 = vsyncpa %s622, 1

</llo_original>
